<compile_context>
chip_gen: v7x
topology: tpu7x:2x2x1
jax: 0.10.0
libtpu: 0.0.40
codegen_flags: <defaults>
</compile_context>

<pallas_src>
import functools

import jax
import jax.numpy as jnp
from jax.experimental import pallas as pl
from jax.experimental.pallas import tpu as pltpu


# ---------------------------------------------------------------------------
# Pallas kernels
# ---------------------------------------------------------------------------
def _group_fold(s, groups):
    """Average per-channel statistics over `groups` interleaved channel groups
    (space-to-depth phases) and tile the result back.  s: (1, 1, groups*C)."""
    c2 = s.shape[-1]
    c = c2 // groups
    acc = s[..., :c]
    for g in range(1, groups):
        acc = acc + s[..., g * c:(g + 1) * c]
    acc = acc * (1.0 / groups)
    return jnp.concatenate([acc] * groups, axis=-1)


def _fused_conv_kernel(*refs, cfg):
    """Fused  [instance-norm + ReLU] -> 3x3 conv (strided) -> [+ shortcut].

    One grid step == one batch element (whole image resident in VMEM; required
    anyway because the fused instance norm needs full-image statistics).

    Stride handling (no dense-compute-then-subsample, no strided memory ops):
      * H stride 2: output rows are picked via slice -> reshape(Ho, sh, ..)[:,0]
        (major-dim only, free).
      * W stride 2: the wrapper passes the input in a free space-to-depth view
        (H, W/2, 2C) with restructured weights, so W-stride is always 1 here.
    """
    H, Wz, C2 = cfg["in_hwc"]
    Ho, Wo, Cout = cfg["out_hwc"]
    KH, KW = cfg["kh"], cfg["kw"]
    sh = cfg["sh"]
    ph, pwl = cfg["pad_h"], cfg["pad_wl"]
    apply_norm = cfg["apply_norm"]
    groups = cfg["norm_groups"]
    eps = cfg["eps"]
    shortcut = cfg["shortcut"]          # None | "identity" | "proj"

    it = iter(refs)
    x_ref = next(it)
    w_ref = next(it)
    b_ref = next(it)
    if shortcut == "identity":
        r_ref = next(it)
    elif shortcut == "proj":
        xs_ref = next(it)
        wsc_ref = next(it)
        bsc_ref = next(it)
    o_ref = next(it)
    xpad_ref = next(it)

    x = x_ref[0].astype(jnp.float32)                       # (H, Wz, C2)

    # ---- fused pre-activation: InstanceNorm2d (affine=False) + ReLU ----
    if apply_norm:
        m = jnp.mean(x, axis=(0, 1), keepdims=True)        # per z-channel
        if groups > 1:                                      # fold s2d phases
            m = _group_fold(m, groups)
        xc = x - m
        v = jnp.mean(xc * xc, axis=(0, 1), keepdims=True)
        if groups > 1:
            v = _group_fold(v, groups)
        x = jnp.maximum(xc * jax.lax.rsqrt(v + eps), 0.0)

    # ---- halo: zero-pad into a VMEM scratch (no HBM round trip) ----
    xpad_ref[...] = jnp.zeros(xpad_ref.shape, xpad_ref.dtype)
    xpad_ref[ph:ph + H, pwl:pwl + Wz, :] = x

    # ---- im2col: one (Ho*Wo, KH*KW*C2) patch matrix, single MXU matmul ----
    taps = []
    for dy in range(KH):
        rows = xpad_ref[dy:dy + sh * Ho]                    # (sh*Ho, Wp, C2)
        if sh > 1:
            rows = rows.reshape(Ho, sh, rows.shape[1], C2)[:, 0]
        for dx in range(KW):
            t = rows[:, dx:dx + Wo, :]                      # (Ho, Wo, C2)
            taps.append(t.reshape(Ho * Wo, C2))
    patch = taps[0] if len(taps) == 1 else jnp.concatenate(taps, axis=-1)
    acc = jnp.dot(patch, w_ref[...], preferred_element_type=jnp.float32)
    acc = acc + b_ref[...]                                  # (Ho*Wo, Cout)

    # ---- fused residual shortcut ----
    if shortcut == "identity":
        acc = acc + r_ref[0].astype(jnp.float32).reshape(Ho * Wo, Cout)
    elif shortcut == "proj":
        sc_sh = cfg["sc_sh"]
        sc_cin = cfg["sc_cin"]
        xs = xs_ref[0].astype(jnp.float32)                  # raw block input
        xs = xs[0:sc_sh * Ho]
        if sc_sh > 1:                                       # rows ::sc_sh
            xs = xs.reshape(Ho, sc_sh, xs.shape[1], xs.shape[2])[:, 0]
        xs = xs[:, 0:Wo, 0:sc_cin]                          # cols/channels of
        sc = jnp.dot(xs.reshape(Ho * Wo, sc_cin), wsc_ref[...],  # x[::sh, ::sw]
                     preferred_element_type=jnp.float32)
        acc = acc + sc + bsc_ref[...]

    # TODO(synk): lane-dense (Ho, Wo*Cout) packed store would avoid masked vst
    #             with Cout < 128; plain NHWC tile kept for clarity.
    o_ref[0] = acc.reshape(Ho, Wo, Cout).astype(o_ref.dtype)


def _instnorm_relu_kernel(x_ref, o_ref, *, eps):
    """Final standalone InstanceNorm2d (affine=False) + ReLU."""
    x = x_ref[0].astype(jnp.float32)
    mean = jnp.mean(x, axis=(0, 1), keepdims=True)
    xc = x - mean
    var = jnp.mean(xc * xc, axis=(0, 1), keepdims=True)
    y = xc * jax.lax.rsqrt(var + eps)
    o_ref[0] = jnp.maximum(y, 0.0).astype(o_ref.dtype)


# ---------------------------------------------------------------------------
# Wrappers around pallas_call
# ---------------------------------------------------------------------------
def _prep_conv_weight(w, sw):
    """Return (w2d, kw_eff, cin_eff, pad_w_left, pad_w_right).

    For W-stride 2, fold the space-to-depth transform of the input into the
    weight so the kernel runs a W-stride-1 conv on the (N, H, W/2, 2*Cin) view.
    """
    KH, KW, Cin, Cout = w.shape
    if sw == 1:
        return w.reshape(KH * KW * Cin, Cout), KW, Cin, 1, 1
    if sw != 2 or KW != 3:
        raise NotImplementedError("only W-stride in {1, 2} with 3x3 kernels")
    wz = jnp.zeros((KH, 2, 2, Cin, Cout), w.dtype)
    wz = wz.at[:, 0, 1].set(w[:, 0])      # x col 2j-1  <- z[j-1, phase 1]
    wz = wz.at[:, 1, 0].set(w[:, 1])      # x col 2j    <- z[j,   phase 0]
    wz = wz.at[:, 1, 1].set(w[:, 2])      # x col 2j+1  <- z[j,   phase 1]
    return wz.reshape(KH * 2 * 2 * Cin, Cout), 2, 2 * Cin, 1, 0


def fused_conv(x, w, b, *, stride=(1, 1), apply_norm=True, eps=1e-5,
               shortcut=None):
    """[instnorm+ReLU] -> 3x3 conv (torch Conv2d, zero pad 1) -> [+ shortcut]
    as a single Pallas kernel.  x: NHWC, w: HWIO.

    shortcut: None
            | ("identity", r)                        r: (N, Ho, Wo, Cout)
            | ("proj", x_raw, w_sc, b_sc, stride)    1x1 conv on x_raw[::sh,::sw]
    """
    N, H, W, Cin = x.shape
    KH, KW, _, Cout = w.shape
    sh, sw = stride
    assert (KH, KW) == (3, 3)
    assert H % sh == 0 and W % sw == 0, "spatial dims must divide the stride"
    Ho, Wo = H // sh, W // sw

    w2d, kw_eff, c_eff, pwl, pwr = _prep_conv_weight(w, sw)
    x_in = x.reshape(N, H, W // 2, 2 * Cin) if sw == 2 else x   # free reshape
    Wz = x_in.shape[2]
    ph = 1
    Hp, Wp = H + 2 * ph, Wz + pwl + pwr

    cfg = dict(in_hwc=(H, Wz, c_eff), out_hwc=(Ho, Wo, Cout),
               kh=KH, kw=kw_eff, sh=sh, pad_h=ph, pad_wl=pwl,
               apply_norm=apply_norm, norm_groups=sw if apply_norm else 1,
               eps=eps, shortcut=None)

    inputs = [x_in, w2d, b.reshape(1, Cout).astype(jnp.float32)]
    in_specs = [
        pl.BlockSpec((1, H, Wz, c_eff), lambda n: (n, 0, 0, 0)),
        pl.BlockSpec((KH * kw_eff * c_eff, Cout), lambda n: (0, 0)),
        pl.BlockSpec((1, Cout), lambda n: (0, 0)),
    ]

    if shortcut is not None:
        if shortcut[0] == "identity":
            _, r = shortcut
            assert r.shape == (N, Ho, Wo, Cout)
            cfg["shortcut"] = "identity"
            inputs.append(r)
            in_specs.append(
                pl.BlockSpec((1, Ho, Wo, Cout), lambda n: (n, 0, 0, 0)))
        else:
            _, x_raw, w_sc, b_sc, (ssh, ssw) = shortcut
            Ns, Hs, Ws, Cs = x_raw.shape
            assert Ns == N and Hs // ssh == Ho and Ws // ssw == Wo
            x_sc = x_raw.reshape(Ns, Hs, Ws // 2, 2 * Cs) if ssw == 2 else x_raw
            cfg["shortcut"] = "proj"
            cfg["sc_sh"] = ssh
            cfg["sc_cin"] = Cs
            inputs += [x_sc,
                       w_sc.reshape(Cs, Cout),
                       b_sc.reshape(1, Cout).astype(jnp.float32)]
            in_specs += [
                pl.BlockSpec((1,) + x_sc.shape[1:], lambda n: (n, 0, 0, 0)),
                pl.BlockSpec((Cs, Cout), lambda n: (0, 0)),
                pl.BlockSpec((1, Cout), lambda n: (0, 0)),
            ]

    return pl.pallas_call(
        functools.partial(_fused_conv_kernel, cfg=cfg),
        out_shape=jax.ShapeDtypeStruct((N, Ho, Wo, Cout), x.dtype),
        grid=(N,),
        in_specs=in_specs,
        out_specs=pl.BlockSpec((1, Ho, Wo, Cout), lambda n: (n, 0, 0, 0)),
        scratch_shapes=[pltpu.VMEM((Hp, Wp, c_eff), jnp.float32)],
        compiler_params=pltpu.CompilerParams(
            dimension_semantics=("parallel",)),
    )(*inputs)


def instance_norm_relu(x, eps=1e-5):
    N, H, W, C = x.shape
    return pl.pallas_call(
        functools.partial(_instnorm_relu_kernel, eps=eps),
        out_shape=jax.ShapeDtypeStruct((N, H, W, C), x.dtype),
        grid=(N,),
        in_specs=[pl.BlockSpec((1, H, W, C), lambda n: (n, 0, 0, 0))],
        out_specs=pl.BlockSpec((1, H, W, C), lambda n: (n, 0, 0, 0)),
        compiler_params=pltpu.CompilerParams(
            dimension_semantics=("parallel",)),
    )(x)


# ---------------------------------------------------------------------------
# Parameter initialization (deterministic, kaiming_normal_ for conv weights)
# ---------------------------------------------------------------------------
def _conv_params(key, kh, kw, cin, cout):
    kw_key, kb_key = jax.random.split(key)
    fan_in = kh * kw * cin
    std = (2.0 / fan_in) ** 0.5                       # kaiming_normal_
    w = std * jax.random.normal(kw_key, (kh, kw, cin, cout), jnp.float32)
    bound = 1.0 / fan_in ** 0.5                       # torch Conv2d bias init
    b = jax.random.uniform(kb_key, (cout,), jnp.float32, -bound, bound)
    return {"w": w, "b": b}


def build_encoder(key, input_shape, num_conv_blocks, num_channels_list,
                  skip=True, kernel_size=3):
    if len(num_channels_list) != num_conv_blocks:
        raise ValueError("`num_channels_list` must match `num_conv_blocks`")
    in_channels = input_shape[0]
    keys = iter(jax.random.split(key, 8 * num_conv_blocks + 8))
    blocks = []

    # first plain convolution
    p0 = _conv_params(next(keys), 3, 3, in_channels, num_channels_list[0])
    blocks.append(("conv", {"w": p0["w"], "b": p0["b"], "stride": (1, 1)}))
    out_ch = num_channels_list[0]

    def add_block(num_filters, stride=(1, 1)):
        nonlocal out_ch
        p = {
            "c1": _conv_params(next(keys), kernel_size, kernel_size,
                               out_ch, num_filters),
            "c2": _conv_params(next(keys), kernel_size, kernel_size,
                               num_filters, num_filters),
            "stride": stride,
            "skip": skip,
        }
        if skip and (stride != (1, 1) or out_ch != num_filters):
            p["sc"] = _conv_params(next(keys), 1, 1, out_ch, num_filters)
        blocks.append(("resblock", p))
        out_ch = num_filters

    add_block(num_channels_list[0])
    for i in range(1, num_conv_blocks - 1):
        add_block(num_channels_list[i], stride=(2, 2))
        add_block(num_channels_list[i])
    add_block(num_channels_list[-1], stride=(2, 1))
    blocks.append(("norm_nlin", {}))          # InstanceNorm + ReLU (fused)
    return blocks


# ---------------------------------------------------------------------------
# Forward pass (mirrors encoder.forward, incl. long-skip collection)
# ---------------------------------------------------------------------------
def _residual_block(x, p):
    stride = p["stride"]
    # conv1 with fused pre-activation norm+ReLU (strided output computed
    # directly, no dense-then-subsample).
    h1 = fused_conv(x, p["c1"]["w"], p["c1"]["b"], stride=stride,
                    apply_norm=True)
    if p["skip"]:
        if "sc" in p:
            shortcut = ("proj", x, p["sc"]["w"], p["sc"]["b"], stride)
        else:
            shortcut = ("identity", x)
    else:
        shortcut = None
    # conv2 with fused norm+ReLU and fused residual shortcut.
    return fused_conv(h1, p["c2"]["w"], p["c2"]["b"], stride=(1, 1),
                      apply_norm=True, shortcut=shortcut)


def encoder_forward(blocks, x_nchw):
    x = jnp.transpose(x_nchw, (0, 2, 3, 1))   # NCHW -> NHWC
    skips = []
    size = x.shape
    out = x
    for kind, p in blocks:
        out_prev = out
        if kind == "conv":
            out = fused_conv(out_prev, p["w"], p["b"], stride=p["stride"],
                             apply_norm=False)
        elif kind == "resblock":
            out = _residual_block(out_prev, p)
        else:  # final instance norm + ReLU
            out = instance_norm_relu(out_prev)
        # PyTorch compares spatial (H, W); NHWC -> dims 1, 2
        if out.shape[1] != size[1] or out.shape[2] != size[2]:
            size = out.shape
            skips.append(jnp.transpose(out_prev, (0, 3, 1, 2)))  # NCHW skips
    return jnp.transpose(out, (0, 3, 1, 2)), skips


# ---------------------------------------------------------------------------
if __name__ == "__main__":
    key = jax.random.PRNGKey(0)
    k_param, k_x = jax.random.split(key)

    # small BraTS-like config: 4 input modalities, 16x16 spatial, 3 conv blocks
    N, C, H, W = 2, 4, 16, 16
    num_conv_blocks = 3
    num_channels_list = [8, 16, 32]

    x = jax.random.normal(k_x, (N, C, H, W), jnp.float32)
    blocks = build_encoder(k_param, input_shape=(C, H, W),
                           num_conv_blocks=num_conv_blocks,
                           num_channels_list=num_channels_list, skip=True)

    out, skips = encoder_forward(blocks, x)
    out = jax.block_until_ready(out)
    skips = [jax.block_until_ready(s) for s in skips]

    # sanity checks on the reproduced shapes / values
    assert out.shape == (N, 32, 4, 8), out.shape
    assert len(skips) == 2
    assert skips[0].shape == (N, 8, 16, 16), skips[0].shape
    assert skips[1].shape == (N, 16, 8, 8), skips[1].shape
    assert bool(jnp.all(jnp.isfinite(out)))
    assert bool(jnp.all(out >= 0.0))  # final module is ReLU

    print("KERNEL_OK")
</pallas_src>

<mosaic_0001>
module attributes {stable_mosaic.version = 11 : i64} {
  func.func @_fused_conv_kernel(%arg0: i32, %arg1: memref<1x16x16x4xf32, #tpu.memory_space<vmem>>, %arg2: memref<36x8xf32, #tpu.memory_space<vmem>>, %arg3: memref<1x8xf32, #tpu.memory_space<vmem>>, %arg4: memref<1x16x16x8xf32, #tpu.memory_space<vmem>>, %arg5: memref<18x18x4xf32, #tpu.memory_space<vmem>>) attributes {dimension_semantics = [#tpu.dimension_semantics<parallel>], iteration_bounds = array<i64: 2>, scalar_prefetch = 0 : i64, scratch_operands = 1 : i64, tpu.core_type = #tpu.core_type<tc>, window_params = [{transform_indices = @transform_0, window_bounds = array<i64: 1, 16, 16, 4>}, {pipeline_mode = #tpu.pipeline_mode<synchronous>, transform_indices = @transform_1, window_bounds = array<i64: 36, 8>}, {pipeline_mode = #tpu.pipeline_mode<synchronous>, transform_indices = @transform_2, window_bounds = array<i64: 1, 8>}, {transform_indices = @transform_3, window_bounds = array<i64: 1, 16, 16, 8>}]} {
    %c0 = arith.constant 0 : index
    %c0_0 = arith.constant 0 : index
    %c0_1 = arith.constant 0 : index
    %c0_2 = arith.constant 0 : index
    %0 = vector.load %arg1[%c0, %c0_0, %c0_1, %c0_2] : memref<1x16x16x4xf32, #tpu.memory_space<vmem>>, vector<1x16x16x4xf32>
    %1 = vector.shape_cast %0 : vector<1x16x16x4xf32> to vector<16x16x4xf32>
    %cst = arith.constant 0.000000e+00 : f32
    %2 = vector.broadcast %cst : f32 to vector<18x18x4xf32>
    %c0_3 = arith.constant 0 : index
    %c0_4 = arith.constant 0 : index
    %c0_5 = arith.constant 0 : index
    %3 = vector.load %arg5[%c0_3, %c0_4, %c0_5] : memref<18x18x4xf32, #tpu.memory_space<vmem>>, vector<18x18x4xf32>
    tpu.vector_store %arg5[%c0_3, %c0_4, %c0_5], %2 {strides = array<i32>} : memref<18x18x4xf32, #tpu.memory_space<vmem>>, vector<18x18x4xf32>,
    %c1 = arith.constant 1 : index
    %c1_6 = arith.constant 1 : index
    %c0_7 = arith.constant 0 : index
    %4 = vector.load %arg5[%c1, %c1_6, %c0_7] : memref<18x18x4xf32, #tpu.memory_space<vmem>>, vector<16x16x4xf32>
    tpu.vector_store %arg5[%c1, %c1_6, %c0_7], %1 {strides = array<i32>} : memref<18x18x4xf32, #tpu.memory_space<vmem>>, vector<16x16x4xf32>,
    %c0_8 = arith.constant 0 : index
    %c0_9 = arith.constant 0 : index
    %c0_10 = arith.constant 0 : index
    %5 = vector.load %arg5[%c0_8, %c0_9, %c0_10] : memref<18x18x4xf32, #tpu.memory_space<vmem>>, vector<16x18x4xf32>
    %6 = vector.extract_strided_slice %5 {offsets = [0, 0, 0], sizes = [16, 16, 4], strides = [1, 1, 1]} : vector<16x18x4xf32> to vector<16x16x4xf32>
    %7 = vector.shape_cast %6 : vector<16x16x4xf32> to vector<256x4xf32>
    %8 = vector.extract_strided_slice %5 {offsets = [0, 1, 0], sizes = [16, 16, 4], strides = [1, 1, 1]} : vector<16x18x4xf32> to vector<16x16x4xf32>
    %9 = vector.shape_cast %8 : vector<16x16x4xf32> to vector<256x4xf32>
    %10 = vector.extract_strided_slice %5 {offsets = [0, 2, 0], sizes = [16, 16, 4], strides = [1, 1, 1]} : vector<16x18x4xf32> to vector<16x16x4xf32>
    %11 = vector.shape_cast %10 : vector<16x16x4xf32> to vector<256x4xf32>
    %c1_11 = arith.constant 1 : index
    %c0_12 = arith.constant 0 : index
    %c0_13 = arith.constant 0 : index
    %12 = vector.load %arg5[%c1_11, %c0_12, %c0_13] : memref<18x18x4xf32, #tpu.memory_space<vmem>>, vector<16x18x4xf32>
    %13 = vector.extract_strided_slice %12 {offsets = [0, 0, 0], sizes = [16, 16, 4], strides = [1, 1, 1]} : vector<16x18x4xf32> to vector<16x16x4xf32>
    %14 = vector.shape_cast %13 : vector<16x16x4xf32> to vector<256x4xf32>
    %15 = vector.extract_strided_slice %12 {offsets = [0, 1, 0], sizes = [16, 16, 4], strides = [1, 1, 1]} : vector<16x18x4xf32> to vector<16x16x4xf32>
    %16 = vector.shape_cast %15 : vector<16x16x4xf32> to vector<256x4xf32>
    %17 = vector.extract_strided_slice %12 {offsets = [0, 2, 0], sizes = [16, 16, 4], strides = [1, 1, 1]} : vector<16x18x4xf32> to vector<16x16x4xf32>
    %18 = vector.shape_cast %17 : vector<16x16x4xf32> to vector<256x4xf32>
    %c2 = arith.constant 2 : index
    %c0_14 = arith.constant 0 : index
    %c0_15 = arith.constant 0 : index
    %19 = vector.load %arg5[%c2, %c0_14, %c0_15] : memref<18x18x4xf32, #tpu.memory_space<vmem>>, vector<16x18x4xf32>
    %20 = vector.extract_strided_slice %19 {offsets = [0, 0, 0], sizes = [16, 16, 4], strides = [1, 1, 1]} : vector<16x18x4xf32> to vector<16x16x4xf32>
    %21 = vector.shape_cast %20 : vector<16x16x4xf32> to vector<256x4xf32>
    %22 = vector.extract_strided_slice %19 {offsets = [0, 1, 0], sizes = [16, 16, 4], strides = [1, 1, 1]} : vector<16x18x4xf32> to vector<16x16x4xf32>
    %23 = vector.shape_cast %22 : vector<16x16x4xf32> to vector<256x4xf32>
    %24 = vector.extract_strided_slice %19 {offsets = [0, 2, 0], sizes = [16, 16, 4], strides = [1, 1, 1]} : vector<16x18x4xf32> to vector<16x16x4xf32>
    %25 = vector.shape_cast %24 : vector<16x16x4xf32> to vector<256x4xf32>
    %26 = tpu.concatenate %7, %9, %11, %14, %16, %18, %21, %23, %25 in 1 : vector<256x4xf32>, vector<256x4xf32>, vector<256x4xf32>, vector<256x4xf32>, vector<256x4xf32>, vector<256x4xf32>, vector<256x4xf32>, vector<256x4xf32>, vector<256x4xf32> -> vector<256x36xf32>
    %c0_16 = arith.constant 0 : index
    %c0_17 = arith.constant 0 : index
    %27 = vector.load %arg2[%c0_16, %c0_17] : memref<36x8xf32, #tpu.memory_space<vmem>>, vector<36x8xf32>
    %cst_18 = arith.constant dense<0.000000e+00> : vector<256x8xf32>
    %28 = tpu.matmul %26, %27, %cst_18 {dimension_numbers = #tpu.dot_dimension_numbers<[1], [0], [0], [1], [0, 0, 1, 1], [], []>} : vector<256x36xf32>, vector<36x8xf32>, vector<256x8xf32> -> vector<256x8xf32>
    %c0_19 = arith.constant 0 : index
    %c0_20 = arith.constant 0 : index
    %29 = vector.load %arg3[%c0_19, %c0_20] : memref<1x8xf32, #tpu.memory_space<vmem>>, vector<1x8xf32>
    %30 = vector.broadcast %29 : vector<1x8xf32> to vector<256x8xf32>
    %31 = arith.addf %28, %30 : vector<256x8xf32>
    %32 = vector.shape_cast %31 : vector<256x8xf32> to vector<16x16x8xf32>
    %c0_21 = arith.constant 0 : index
    %c0_22 = arith.constant 0 : index
    %c0_23 = arith.constant 0 : index
    %c0_24 = arith.constant 0 : index
    %33 = vector.load %arg4[%c0_21, %c0_22, %c0_23, %c0_24] : memref<1x16x16x8xf32, #tpu.memory_space<vmem>>, vector<1x16x16x8xf32>
    %34 = vector.shape_cast %33 : vector<1x16x16x8xf32> to vector<16x16x8xf32>
    %35 = vector.shape_cast %32 : vector<16x16x8xf32> to vector<1x16x16x8xf32>
    tpu.vector_store %arg4[%c0_21, %c0_22, %c0_23, %c0_24], %35 {strides = array<i32>} : memref<1x16x16x8xf32, #tpu.memory_space<vmem>>, vector<1x16x16x8xf32>,
    return
  }
  func.func @transform_0(%arg0: i32) -> (i32, i32, i32, i32) {
    %c0_i32 = arith.constant 0 : i32
    %c0_i32_0 = arith.constant 0 : i32
    %c0_i32_1 = arith.constant 0 : i32
    %c0_i32_2 = arith.constant 0 : i32
    return %arg0, %c0_i32, %c0_i32_0, %c0_i32_1 : i32, i32, i32, i32
  }
  func.func @transform_1(%arg0: i32) -> (i32, i32) {
    %c0_i32 = arith.constant 0 : i32
    %c0_i32_0 = arith.constant 0 : i32
    %c0_i32_1 = arith.constant 0 : i32
    return %c0_i32, %c0_i32_0 : i32, i32
  }
  func.func @transform_2(%arg0: i32) -> (i32, i32) {
    %c0_i32 = arith.constant 0 : i32
    %c0_i32_0 = arith.constant 0 : i32
    %c0_i32_1 = arith.constant 0 : i32
    return %c0_i32, %c0_i32_0 : i32, i32
  }
  func.func @transform_3(%arg0: i32) -> (i32, i32, i32, i32) {
    %c0_i32 = arith.constant 0 : i32
    %c0_i32_0 = arith.constant 0 : i32
    %c0_i32_1 = arith.constant 0 : i32
    %c0_i32_2 = arith.constant 0 : i32
    return %arg0, %c0_i32, %c0_i32_0, %c0_i32_1 : i32, i32, i32, i32
  }
}

</mosaic_0001>

<llo_original>
// kernel: tpu_custom_call.1
$region0: #{tpu_custom_call.1}
  #allocation0 [shape = 'u32[]', space=smem, size = 0x4, offset = 0x4, fixed_abs, tag = 'smem constant byte address 0x4 - core index']
  #allocation1 [shape = 'u32[144,128]{1,0:T(1,128)}', space=vmem, size = 0x12000, scoped, tag = 'internal scratch']
  #allocation2 [shape = 'f32[18,18,4]{2,1,0:T(8,128)}', space=vmem, size = 0x36000, scoped, tag = 'scratch operand']
  %s0 = inlined_call_operand.vmem [shape: f32[2,16,16,4], index: 0, kind: input, shape index: {}]
  %s1 = inlined_call_operand.vmem [shape: f32[36,8], index: 1, kind: input, shape index: {}]
  %s2 = inlined_call_operand.vmem [shape: f32[1,8], index: 2, kind: input, shape index: {}]
  %s3 = inlined_call_operand.vmem [shape: f32[2,16,16,8], index: 3, kind: output, shape index: {}]
  %s4 = sld [smem:[#allocation0]]
  $region45: #{tpu_custom_call.1} parent=0
    _
  %s6 = ssub.s32 1, %s4
  %s7 = scalar_select 0, %s6, %s4
  loop: start=0, step=1, limit=4
  $region2: #{tpu_custom_call.1} parent=0 // loop_pre_header
    _
  $region3: #{tpu_custom_call.1} parent=0 // loop_header
    %s9 = sphi 0, %s13
    %p10 = scmp.ge.s32.totalorder %s9, 4
    %s19 = sphi 0, %s21
    %s22 = sphi 0, %s19
    %s23 = sphi 0, %s22
    %s39 = sphi 0, %s23
    %s43 = sphi 0, %s43
    %s45 = sphi 0, %s43
    %s46 = sphi 0, %s45
    %s60 = sphi 0, %s46
    %s64 = sphi 0, %s64
    %s66 = sphi 0, %s64
    %s67 = sphi 0, %s66
    %s81 = sphi 0, %s67
    %s87 = sphi 0, %s89
    %s90 = sphi 0, %s87
    %s91 = sphi 0, %s90
    %s107 = sphi 0, %s91
  $region4: #{tpu_custom_call.1} parent=0 // loop_header_branch
    %12 = sbr.rel (%p10) target = $region8
  $region5: #{tpu_custom_call.1} parent=0 // loop_body
    %s14 = ssub.s32 %s9, 1
    %s15 = ssub.s32 %s9, 2
    %s16 = sadd.s32 %s9, 1
    %s17 = ssub.s32 %s9, %s16
    %p18 = scmp.eq.s32.totalorder %s17, 0
    %s20 = sadd.s32 %s19, 1
    %s21 = scalar_select %p18, %s19, %s20
    %p24 = pneg %p18
    %p25 = scmp.eq.s32.totalorder %s9, 1
    %p26 = por %p24, %p25
    %p27 = scmp.ne.s32.totalorder %s19, %s22
    %p28 = scmp.eq.s32.totalorder %s9, 0
    %p29 = por %p27, %p28
    %p30 = scmp.ne.s32.totalorder %s19, %s22
    %p31 = scmp.eq.s32.totalorder %s14, 1
    %p32 = por %p30, %p31
    %p33 = scmp.ne.s32.totalorder %s22, %s23
    %p34 = scmp.eq.s32.totalorder %s14, 0
    %p35 = por %p33, %p34
    %p36 = scmp.ne.s32.totalorder %s22, %s23
    %p37 = scmp.eq.s32.totalorder %s15, 1
    %p38 = por %p36, %p37
    %p40 = scmp.ne.s32.totalorder %s23, %s39
    %p41 = scmp.eq.s32.totalorder %s15, 0
    %p42 = por %p40, %p41
    %s44 = sadd.s32 %s43, 1
    %p47 = scmp.eq.s32.totalorder %s9, 1
    %p48 = scmp.ne.s32.totalorder %s43, %s45
    %p49 = scmp.eq.s32.totalorder %s9, 0
    %p50 = por %p48, %p49
    %p51 = scmp.ne.s32.totalorder %s43, %s45
    %p52 = scmp.eq.s32.totalorder %s14, 1
    %p53 = por %p51, %p52
    %p54 = scmp.ne.s32.totalorder %s45, %s46
    %p55 = scmp.eq.s32.totalorder %s14, 0
    %p56 = por %p54, %p55
    %p57 = scmp.ne.s32.totalorder %s45, %s46
    %p58 = scmp.eq.s32.totalorder %s15, 1
    %p59 = por %p57, %p58
    %p61 = scmp.ne.s32.totalorder %s46, %s60
    %p62 = scmp.eq.s32.totalorder %s15, 0
    %p63 = por %p61, %p62
    %s65 = sadd.s32 %s64, 1
    %p68 = scmp.eq.s32.totalorder %s9, 1
    %p69 = scmp.ne.s32.totalorder %s64, %s66
    %p70 = scmp.eq.s32.totalorder %s9, 0
    %p71 = por %p69, %p70
    %p72 = scmp.ne.s32.totalorder %s64, %s66
    %p73 = scmp.eq.s32.totalorder %s14, 1
    %p74 = por %p72, %p73
    %p75 = scmp.ne.s32.totalorder %s66, %s67
    %p76 = scmp.eq.s32.totalorder %s14, 0
    %p77 = por %p75, %p76
    %p78 = scmp.ne.s32.totalorder %s66, %s67
    %p79 = scmp.eq.s32.totalorder %s15, 1
    %p80 = por %p78, %p79
    %p82 = scmp.ne.s32.totalorder %s67, %s81
    %p83 = scmp.eq.s32.totalorder %s15, 0
    %p84 = por %p82, %p83
    %s85 = ssub.s32 %s9, %s16
    %p86 = scmp.eq.s32.totalorder %s85, 0
    %s88 = sadd.s32 %s87, 1
    %s89 = scalar_select %p86, %s87, %s88
    %p92 = pneg %p86
    %p93 = scmp.eq.s32.totalorder %s9, 1
    %p94 = por %p92, %p93
    %p95 = scmp.ne.s32.totalorder %s87, %s90
    %p96 = scmp.eq.s32.totalorder %s9, 0
    %p97 = por %p95, %p96
    %p98 = scmp.ne.s32.totalorder %s87, %s90
    %p99 = scmp.eq.s32.totalorder %s14, 1
    %p100 = por %p98, %p99
    %p101 = scmp.ne.s32.totalorder %s90, %s91
    %p102 = scmp.eq.s32.totalorder %s14, 0
    %p103 = por %p101, %p102
    %p104 = scmp.ne.s32.totalorder %s90, %s91
    %p105 = scmp.eq.s32.totalorder %s15, 1
    %p106 = por %p104, %p105
    %p108 = scmp.ne.s32.totalorder %s91, %s107
    %p109 = scmp.eq.s32.totalorder %s15, 0
    %p110 = por %p108, %p109
    %p111 = scmp.le.s32.totalorder 1, %s9
    %p112 = scmp.lt.s32.totalorder %s9, 3
    %p113 = pnand %p111, %p112
    %p114 = pneg %p113
    // Predicated region
    $region9: #{tpu_custom_call.1} parent=5 // pred_check
      _
    $region10: #{tpu_custom_call.1} parent=5 // pred_check_branch
      %116 = sbr.rel (%p113) target = $region12
    $region11: #{tpu_custom_call.1} parent=5 // pred_region
      %s117 = ssub.s32 %s9, 1
      // Predicated region
      $region13: #{tpu_custom_call.1} parent=11 // pred_check
        %p118 = pneg %p56
      $region14: #{tpu_custom_call.1} parent=11 // pred_check_branch
        %120 = sbr.rel (%p118) target = $region16
      $region15: #{tpu_custom_call.1} parent=11 // pred_region
        _
      $region16: #{tpu_custom_call.1} parent=11 // pred_fallthru
        _
      // Predicated region
      $region17: #{tpu_custom_call.1} parent=11 // pred_check
        %p121 = pneg %p77
      $region18: #{tpu_custom_call.1} parent=11 // pred_check_branch
        %123 = sbr.rel (%p121) target = $region20
      $region19: #{tpu_custom_call.1} parent=11 // pred_region
        _
      $region20: #{tpu_custom_call.1} parent=11 // pred_fallthru
        _
    $region12: #{tpu_custom_call.1} parent=5 // pred_fallthru
      _
    %p124 = scmp.lt.s32.totalorder %s9, 2
    // Predicated region
    $region21: #{tpu_custom_call.1} parent=5 // pred_check
      %p125 = pneg %p124
    $region22: #{tpu_custom_call.1} parent=5 // pred_check_branch
      %127 = sbr.rel (%p125) target = $region24
    $region23: #{tpu_custom_call.1} parent=5 // pred_region
      // Predicated region
      $region25: #{tpu_custom_call.1} parent=23 // pred_check
        %p128 = pneg %p29
      $region26: #{tpu_custom_call.1} parent=23 // pred_check_branch
        %130 = sbr.rel (%p128) target = $region28
      $region27: #{tpu_custom_call.1} parent=23 // pred_region
        %p131 = scmp.lt.s32.totalorder %s9, 1
        %s132 = scalar_select %p131, %s9, 1
        %s133 = smul.addr %s132, 32
        %s134 = smul.addr %s133, 8
        %s135 = scalar_lea.vmem %s0, %s134
      $region28: #{tpu_custom_call.1} parent=23 // pred_fallthru
        _
    $region24: #{tpu_custom_call.1} parent=5 // pred_fallthru
      _
    %p136 = scmp.le.s32.totalorder 1, %s9
    %p137 = scmp.lt.s32.totalorder %s9, 3
    %p138 = pnand %p136, %p137
    %p139 = pneg %p138
    // Predicated region
    $region29: #{tpu_custom_call.1} parent=5 // pred_check
      _
    $region30: #{tpu_custom_call.1} parent=5 // pred_check_branch
      %141 = sbr.rel (%p138) target = $region32
    $region31: #{tpu_custom_call.1} parent=5 // pred_region
      %s142 = ssub.s32 %s9, 1
      %p143 = scmp.lt.s32.totalorder %s14, 1
      %s144 = scalar_select %p143, %s14, 1
      %s145 = smul.addr %s144, 32
      %s146 = smul.addr %s145, 8
      %s147 = scalar_lea.vmem %s0, %s146
      %p148 = pneg %p35
      %p149 = pneg %p32
      %p150 = pneg %p56
      %p151 = pneg %p53
      %p152 = pneg %p77
      %p153 = pneg %p74
      %p154 = pneg %p103
      %p155 = pneg %p100
      %p156 = scmp.lt.s32.totalorder %s14, 1
      %s157 = scalar_select %p156, %s14, 1
      %s158 = smul.addr %s157, 32
      %s159 = smul.addr %s158, 8
      %s160 = scalar_lea.vmem %s3, %s159
      %p161 = scmp.lt.s32.totalorder %s14, 1
      %s162 = scalar_select %p161, %s14, 1
      %s163 = smul.addr %s162, 32
      %s164 = smul.addr %s163, 8
      %s165 = scalar_lea.vmem %s0, %s164
      %p166 = scmp.lt.s32.totalorder %s14, 1
      %s167 = scalar_select %p166, %s14, 1
      %s168 = smul.addr %s167, 32
      %s169 = smul.addr %s168, 8
      %s170 = scalar_lea.vmem %s3, %s169
      %v171 = vld [vmem:[%s165] sm:$0xff]
      %v172 = vld [vmem:[%s165 + $0x8] sm:$0xff]
      %v173 = vld [vmem:[%s165 + $0x10] sm:$0xff]
      %v174 = vld [vmem:[%s165 + $0x18] sm:$0xff]
      %v175 = vld [vmem:[%s165 + $0x20] sm:$0xff]
      %v176 = vld [vmem:[%s165 + $0x28] sm:$0xff]
      %v177 = vld [vmem:[%s165 + $0x30] sm:$0xff]
      %v178 = vld [vmem:[%s165 + $0x38] sm:$0xff]
      %v179 = vld [vmem:[%s165 + $0x40] sm:$0xff]
      %v180 = vld [vmem:[%s165 + $0x48] sm:$0xff]
      %v181 = vld [vmem:[%s165 + $0x50] sm:$0xff]
      %v182 = vld [vmem:[%s165 + $0x58] sm:$0xff]
      %v183 = vld [vmem:[%s165 + $0x60] sm:$0xff]
      %v184 = vld [vmem:[%s165 + $0x68] sm:$0xff]
      %v185 = vld [vmem:[%s165 + $0x70] sm:$0xff]
      %v186 = vld [vmem:[%s165 + $0x78] sm:$0xff]
      %v187 = vld [vmem:[%s165 + $0x80] sm:$0xff]
      %v188 = vld [vmem:[%s165 + $0x88] sm:$0xff]
      %v189 = vld [vmem:[%s165 + $0x90] sm:$0xff]
      %v190 = vld [vmem:[%s165 + $0x98] sm:$0xff]
      %v191 = vld [vmem:[%s165 + $0xa0] sm:$0xff]
      %v192 = vld [vmem:[%s165 + $0xa8] sm:$0xff]
      %v193 = vld [vmem:[%s165 + $0xb0] sm:$0xff]
      %v194 = vld [vmem:[%s165 + $0xb8] sm:$0xff]
      %v195 = vld [vmem:[%s165 + $0xc0] sm:$0xff]
      %v196 = vld [vmem:[%s165 + $0xc8] sm:$0xff]
      %v197 = vld [vmem:[%s165 + $0xd0] sm:$0xff]
      %v198 = vld [vmem:[%s165 + $0xd8] sm:$0xff]
      %v199 = vld [vmem:[%s165 + $0xe0] sm:$0xff]
      %v200 = vld [vmem:[%s165 + $0xe8] sm:$0xff]
      %v201 = vld [vmem:[%s165 + $0xf0] sm:$0xff]
      %v202 = vld [vmem:[%s165 + $0xf8] sm:$0xff]
      %vm203 = vcmask 31744
      %204 = vst.msk [vmem:[#allocation2] sm:$0xff] %vm203, 0.0
      %205 = vst.msk [vmem:[#allocation2 + $0x8] sm:$0xff] %vm203, 0.0
      %vm206 = vcmask 25600
      %207 = vst.msk [vmem:[#allocation2 + $0x10] sm:$0x3] %vm206, 0.0
      %208 = vst.msk [vmem:[#allocation2 + $0x18] sm:$0xff] %vm203, 0.0
      %209 = vst.msk [vmem:[#allocation2 + $0x20] sm:$0xff] %vm203, 0.0
      %210 = vst.msk [vmem:[#allocation2 + $0x28] sm:$0x3] %vm206, 0.0
      %211 = vst.msk [vmem:[#allocation2 + $0x30] sm:$0xff] %vm203, 0.0
      %212 = vst.msk [vmem:[#allocation2 + $0x38] sm:$0xff] %vm203, 0.0
      %213 = vst.msk [vmem:[#allocation2 + $0x40] sm:$0x3] %vm206, 0.0
      %214 = vst.msk [vmem:[#allocation2 + $0x48] sm:$0xff] %vm203, 0.0
      %215 = vst.msk [vmem:[#allocation2 + $0x50] sm:$0xff] %vm203, 0.0
      %216 = vst.msk [vmem:[#allocation2 + $0x58] sm:$0x3] %vm206, 0.0
      %217 = vst.msk [vmem:[#allocation2 + $0x60] sm:$0xff] %vm203, 0.0
      %218 = vst.msk [vmem:[#allocation2 + $0x68] sm:$0xff] %vm203, 0.0
      %219 = vst.msk [vmem:[#allocation2 + $0x70] sm:$0x3] %vm206, 0.0
      %220 = vst.msk [vmem:[#allocation2 + $0x78] sm:$0xff] %vm203, 0.0
      %221 = vst.msk [vmem:[#allocation2 + $0x80] sm:$0xff] %vm203, 0.0
      %222 = vst.msk [vmem:[#allocation2 + $0x88] sm:$0x3] %vm206, 0.0
      %223 = vst.msk [vmem:[#allocation2 + $0x90] sm:$0xff] %vm203, 0.0
      %224 = vst.msk [vmem:[#allocation2 + $0x98] sm:$0xff] %vm203, 0.0
      %225 = vst.msk [vmem:[#allocation2 + $0xa0] sm:$0x3] %vm206, 0.0
      %226 = vst.msk [vmem:[#allocation2 + $0xa8] sm:$0xff] %vm203, 0.0
      %227 = vst.msk [vmem:[#allocation2 + $0xb0] sm:$0xff] %vm203, 0.0
      %228 = vst.msk [vmem:[#allocation2 + $0xb8] sm:$0x3] %vm206, 0.0
      %229 = vst.msk [vmem:[#allocation2 + $0xc0] sm:$0xff] %vm203, 0.0
      %230 = vst.msk [vmem:[#allocation2 + $0xc8] sm:$0xff] %vm203, 0.0
      %231 = vst.msk [vmem:[#allocation2 + $0xd0] sm:$0x3] %vm206, 0.0
      %232 = vst.msk [vmem:[#allocation2 + $0xd8] sm:$0xff] %vm203, 0.0
      %233 = vst.msk [vmem:[#allocation2 + $0xe0] sm:$0xff] %vm203, 0.0
      %234 = vst.msk [vmem:[#allocation2 + $0xe8] sm:$0x3] %vm206, 0.0
      %235 = vst.msk [vmem:[#allocation2 + $0xf0] sm:$0xff] %vm203, 0.0
      %236 = vst.msk [vmem:[#allocation2 + $0xf8] sm:$0xff] %vm203, 0.0
      %237 = vst.msk [vmem:[#allocation2 + $0x100] sm:$0x3] %vm206, 0.0
      %238 = vst.msk [vmem:[#allocation2 + $0x108] sm:$0xff] %vm203, 0.0
      %239 = vst.msk [vmem:[#allocation2 + $0x110] sm:$0xff] %vm203, 0.0
      %240 = vst.msk [vmem:[#allocation2 + $0x118] sm:$0x3] %vm206, 0.0
      %241 = vst.msk [vmem:[#allocation2 + $0x120] sm:$0xff] %vm203, 0.0
      %242 = vst.msk [vmem:[#allocation2 + $0x128] sm:$0xff] %vm203, 0.0
      %243 = vst.msk [vmem:[#allocation2 + $0x130] sm:$0x3] %vm206, 0.0
      %244 = vst.msk [vmem:[#allocation2 + $0x138] sm:$0xff] %vm203, 0.0
      %245 = vst.msk [vmem:[#allocation2 + $0x140] sm:$0xff] %vm203, 0.0
      %246 = vst.msk [vmem:[#allocation2 + $0x148] sm:$0x3] %vm206, 0.0
      %247 = vst.msk [vmem:[#allocation2 + $0x150] sm:$0xff] %vm203, 0.0
      %248 = vst.msk [vmem:[#allocation2 + $0x158] sm:$0xff] %vm203, 0.0
      %249 = vst.msk [vmem:[#allocation2 + $0x160] sm:$0x3] %vm206, 0.0
      %250 = vst.msk [vmem:[#allocation2 + $0x168] sm:$0xff] %vm203, 0.0
      %251 = vst.msk [vmem:[#allocation2 + $0x170] sm:$0xff] %vm203, 0.0
      %252 = vst.msk [vmem:[#allocation2 + $0x178] sm:$0x3] %vm206, 0.0
      %253 = vst.msk [vmem:[#allocation2 + $0x180] sm:$0xff] %vm203, 0.0
      %254 = vst.msk [vmem:[#allocation2 + $0x188] sm:$0xff] %vm203, 0.0
      %255 = vst.msk [vmem:[#allocation2 + $0x190] sm:$0x3] %vm206, 0.0
      %256 = vst.msk [vmem:[#allocation2 + $0x198] sm:$0xff] %vm203, 0.0
      %257 = vst.msk [vmem:[#allocation2 + $0x1a0] sm:$0xff] %vm203, 0.0
      %258 = vst.msk [vmem:[#allocation2 + $0x1a8] sm:$0x3] %vm206, 0.0
      %s259 = scalar_lea.vmem [#allocation2], 24
      %260 = vst.msk [vmem:[%s259 + $0x1] sm:$0xff] %vm203, %v171
      %261 = vst.msk [vmem:[%s259 + $0x9] sm:$0xff] %vm203, %v172
      %262 = vst.msk [vmem:[%s259 + $0x19] sm:$0xff] %vm203, %v173
      %263 = vst.msk [vmem:[%s259 + $0x21] sm:$0xff] %vm203, %v174
      %264 = vst.msk [vmem:[%s259 + $0x31] sm:$0xff] %vm203, %v175
      %265 = vst.msk [vmem:[%s259 + $0x39] sm:$0xff] %vm203, %v176
      %266 = vst.msk [vmem:[%s259 + $0x49] sm:$0xff] %vm203, %v177
      %267 = vst.msk [vmem:[%s259 + $0x51] sm:$0xff] %vm203, %v178
      %268 = vst.msk [vmem:[%s259 + $0x61] sm:$0xff] %vm203, %v179
      %269 = vst.msk [vmem:[%s259 + $0x69] sm:$0xff] %vm203, %v180
      %270 = vst.msk [vmem:[%s259 + $0x79] sm:$0xff] %vm203, %v181
      %271 = vst.msk [vmem:[%s259 + $0x81] sm:$0xff] %vm203, %v182
      %272 = vst.msk [vmem:[%s259 + $0x91] sm:$0xff] %vm203, %v183
      %273 = vst.msk [vmem:[%s259 + $0x99] sm:$0xff] %vm203, %v184
      %274 = vst.msk [vmem:[%s259 + $0xa9] sm:$0xff] %vm203, %v185
      %275 = vst.msk [vmem:[%s259 + $0xb1] sm:$0xff] %vm203, %v186
      %276 = vst.msk [vmem:[%s259 + $0xc1] sm:$0xff] %vm203, %v187
      %277 = vst.msk [vmem:[%s259 + $0xc9] sm:$0xff] %vm203, %v188
      %278 = vst.msk [vmem:[%s259 + $0xd9] sm:$0xff] %vm203, %v189
      %279 = vst.msk [vmem:[%s259 + $0xe1] sm:$0xff] %vm203, %v190
      %280 = vst.msk [vmem:[%s259 + $0xf1] sm:$0xff] %vm203, %v191
      %281 = vst.msk [vmem:[%s259 + $0xf9] sm:$0xff] %vm203, %v192
      %282 = vst.msk [vmem:[%s259 + $0x109] sm:$0xff] %vm203, %v193
      %283 = vst.msk [vmem:[%s259 + $0x111] sm:$0xff] %vm203, %v194
      %284 = vst.msk [vmem:[%s259 + $0x121] sm:$0xff] %vm203, %v195
      %285 = vst.msk [vmem:[%s259 + $0x129] sm:$0xff] %vm203, %v196
      %286 = vst.msk [vmem:[%s259 + $0x139] sm:$0xff] %vm203, %v197
      %287 = vst.msk [vmem:[%s259 + $0x141] sm:$0xff] %vm203, %v198
      %288 = vst.msk [vmem:[%s259 + $0x151] sm:$0xff] %vm203, %v199
      %289 = vst.msk [vmem:[%s259 + $0x159] sm:$0xff] %vm203, %v200
      %290 = vst.msk [vmem:[%s259 + $0x169] sm:$0xff] %vm203, %v201
      %291 = vst.msk [vmem:[%s259 + $0x171] sm:$0xff] %vm203, %v202
      %v292 = vld [vmem:[#allocation2] sm:$0xff]
      %v293 = vld [vmem:[#allocation2 + $0x8] sm:$0xff]
      %v294 = vld [vmem:[#allocation2 + $0x10] sm:$0x3]
      %v295 = vld [vmem:[#allocation2 + $0x18] sm:$0xff]
      %v296 = vld [vmem:[#allocation2 + $0x20] sm:$0xff]
      %v297 = vld [vmem:[#allocation2 + $0x28] sm:$0x3]
      %v298 = vld [vmem:[#allocation2 + $0x30] sm:$0xff]
      %v299 = vld [vmem:[#allocation2 + $0x38] sm:$0xff]
      %v300 = vld [vmem:[#allocation2 + $0x40] sm:$0x3]
      %v301 = vld [vmem:[#allocation2 + $0x48] sm:$0xff]
      %v302 = vld [vmem:[#allocation2 + $0x50] sm:$0xff]
      %v303 = vld [vmem:[#allocation2 + $0x58] sm:$0x3]
      %v304 = vld [vmem:[#allocation2 + $0x60] sm:$0xff]
      %v305 = vld [vmem:[#allocation2 + $0x68] sm:$0xff]
      %v306 = vld [vmem:[#allocation2 + $0x70] sm:$0x3]
      %v307 = vld [vmem:[#allocation2 + $0x78] sm:$0xff]
      %v308 = vld [vmem:[#allocation2 + $0x80] sm:$0xff]
      %v309 = vld [vmem:[#allocation2 + $0x88] sm:$0x3]
      %v310 = vld [vmem:[#allocation2 + $0x90] sm:$0xff]
      %v311 = vld [vmem:[#allocation2 + $0x98] sm:$0xff]
      %v312 = vld [vmem:[#allocation2 + $0xa0] sm:$0x3]
      %v313 = vld [vmem:[#allocation2 + $0xa8] sm:$0xff]
      %v314 = vld [vmem:[#allocation2 + $0xb0] sm:$0xff]
      %v315 = vld [vmem:[#allocation2 + $0xb8] sm:$0x3]
      %v316 = vld [vmem:[#allocation2 + $0xc0] sm:$0xff]
      %v317 = vld [vmem:[#allocation2 + $0xc8] sm:$0xff]
      %v318 = vld [vmem:[#allocation2 + $0xd0] sm:$0x3]
      %v319 = vld [vmem:[#allocation2 + $0xd8] sm:$0xff]
      %v320 = vld [vmem:[#allocation2 + $0xe0] sm:$0xff]
      %v321 = vld [vmem:[#allocation2 + $0xe8] sm:$0x3]
      %v322 = vld [vmem:[#allocation2 + $0xf0] sm:$0xff]
      %v323 = vld [vmem:[#allocation2 + $0xf8] sm:$0xff]
      %v324 = vld [vmem:[#allocation2 + $0x100] sm:$0x3]
      %v325 = vld [vmem:[#allocation2 + $0x108] sm:$0xff]
      %v326 = vld [vmem:[#allocation2 + $0x110] sm:$0xff]
      %v327 = vld [vmem:[#allocation2 + $0x118] sm:$0x3]
      %v328 = vld [vmem:[#allocation2 + $0x120] sm:$0xff]
      %v329 = vld [vmem:[#allocation2 + $0x128] sm:$0xff]
      %v330 = vld [vmem:[#allocation2 + $0x130] sm:$0x3]
      %v331 = vld [vmem:[#allocation2 + $0x138] sm:$0xff]
      %v332 = vld [vmem:[#allocation2 + $0x140] sm:$0xff]
      %v333 = vld [vmem:[#allocation2 + $0x148] sm:$0x3]
      %v334 = vld [vmem:[#allocation2 + $0x150] sm:$0xff]
      %v335 = vld [vmem:[#allocation2 + $0x158] sm:$0xff]
      %v336 = vld [vmem:[#allocation2 + $0x160] sm:$0x3]
      %v337 = vld [vmem:[#allocation2 + $0x168] sm:$0xff]
      %v338 = vld [vmem:[#allocation2 + $0x170] sm:$0xff]
      %v339 = vld [vmem:[#allocation2 + $0x178] sm:$0x3]
      %vm388 = vcmask 1046528
      %v389 = vrot.slane %v292, 1
      %v390 = vrot.slane %v293, 1
      %v391 = vsel %vm388, %v389, %v390
      %v392 = vrot.slane %v294, 1
      %v393 = vsel %vm388, %v390, %v392
      %v394 = vrot.slane %v295, 1
      %v395 = vrot.slane %v296, 1
      %v396 = vsel %vm388, %v394, %v395
      %v397 = vrot.slane %v297, 1
      %v398 = vsel %vm388, %v395, %v397
      %v399 = vrot.slane %v298, 1
      %v400 = vrot.slane %v299, 1
      %v401 = vsel %vm388, %v399, %v400
      %v402 = vrot.slane %v300, 1
      %v403 = vsel %vm388, %v400, %v402
      %v404 = vrot.slane %v301, 1
      %v405 = vrot.slane %v302, 1
      %v406 = vsel %vm388, %v404, %v405
      %v407 = vrot.slane %v303, 1
      %v408 = vsel %vm388, %v405, %v407
      %v409 = vrot.slane %v304, 1
      %v410 = vrot.slane %v305, 1
      %v411 = vsel %vm388, %v409, %v410
      %v412 = vrot.slane %v306, 1
      %v413 = vsel %vm388, %v410, %v412
      %v414 = vrot.slane %v307, 1
      %v415 = vrot.slane %v308, 1
      %v416 = vsel %vm388, %v414, %v415
      %v417 = vrot.slane %v309, 1
      %v418 = vsel %vm388, %v415, %v417
      %v419 = vrot.slane %v310, 1
      %v420 = vrot.slane %v311, 1
      %v421 = vsel %vm388, %v419, %v420
      %v422 = vrot.slane %v312, 1
      %v423 = vsel %vm388, %v420, %v422
      %v424 = vrot.slane %v313, 1
      %v425 = vrot.slane %v314, 1
      %v426 = vsel %vm388, %v424, %v425
      %v427 = vrot.slane %v315, 1
      %v428 = vsel %vm388, %v425, %v427
      %v429 = vrot.slane %v316, 1
      %v430 = vrot.slane %v317, 1
      %v431 = vsel %vm388, %v429, %v430
      %v432 = vrot.slane %v318, 1
      %v433 = vsel %vm388, %v430, %v432
      %v434 = vrot.slane %v319, 1
      %v435 = vrot.slane %v320, 1
      %v436 = vsel %vm388, %v434, %v435
      %v437 = vrot.slane %v321, 1
      %v438 = vsel %vm388, %v435, %v437
      %v439 = vrot.slane %v322, 1
      %v440 = vrot.slane %v323, 1
      %v441 = vsel %vm388, %v439, %v440
      %v442 = vrot.slane %v324, 1
      %v443 = vsel %vm388, %v440, %v442
      %v444 = vrot.slane %v325, 1
      %v445 = vrot.slane %v326, 1
      %v446 = vsel %vm388, %v444, %v445
      %v447 = vrot.slane %v327, 1
      %v448 = vsel %vm388, %v445, %v447
      %v449 = vrot.slane %v328, 1
      %v450 = vrot.slane %v329, 1
      %v451 = vsel %vm388, %v449, %v450
      %v452 = vrot.slane %v330, 1
      %v453 = vsel %vm388, %v450, %v452
      %v454 = vrot.slane %v331, 1
      %v455 = vrot.slane %v332, 1
      %v456 = vsel %vm388, %v454, %v455
      %v457 = vrot.slane %v333, 1
      %v458 = vsel %vm388, %v455, %v457
      %v459 = vrot.slane %v334, 1
      %v460 = vrot.slane %v335, 1
      %v461 = vsel %vm388, %v459, %v460
      %v462 = vrot.slane %v336, 1
      %v463 = vsel %vm388, %v460, %v462
      %v464 = vrot.slane %v337, 1
      %v465 = vrot.slane %v338, 1
      %v466 = vsel %vm388, %v464, %v465
      %v467 = vrot.slane %v339, 1
      %v468 = vsel %vm388, %v465, %v467
      %vm469 = vcmask 1045504
      %v470 = vrot.slane %v292, 2
      %v471 = vrot.slane %v293, 2
      %v472 = vsel %vm469, %v470, %v471
      %v473 = vrot.slane %v294, 2
      %v474 = vsel %vm469, %v471, %v473
      %v475 = vrot.slane %v295, 2
      %v476 = vrot.slane %v296, 2
      %v477 = vsel %vm469, %v475, %v476
      %v478 = vrot.slane %v297, 2
      %v479 = vsel %vm469, %v476, %v478
      %v480 = vrot.slane %v298, 2
      %v481 = vrot.slane %v299, 2
      %v482 = vsel %vm469, %v480, %v481
      %v483 = vrot.slane %v300, 2
      %v484 = vsel %vm469, %v481, %v483
      %v485 = vrot.slane %v301, 2
      %v486 = vrot.slane %v302, 2
      %v487 = vsel %vm469, %v485, %v486
      %v488 = vrot.slane %v303, 2
      %v489 = vsel %vm469, %v486, %v488
      %v490 = vrot.slane %v304, 2
      %v491 = vrot.slane %v305, 2
      %v492 = vsel %vm469, %v490, %v491
      %v493 = vrot.slane %v306, 2
      %v494 = vsel %vm469, %v491, %v493
      %v495 = vrot.slane %v307, 2
      %v496 = vrot.slane %v308, 2
      %v497 = vsel %vm469, %v495, %v496
      %v498 = vrot.slane %v309, 2
      %v499 = vsel %vm469, %v496, %v498
      %v500 = vrot.slane %v310, 2
      %v501 = vrot.slane %v311, 2
      %v502 = vsel %vm469, %v500, %v501
      %v503 = vrot.slane %v312, 2
      %v504 = vsel %vm469, %v501, %v503
      %v505 = vrot.slane %v313, 2
      %v506 = vrot.slane %v314, 2
      %v507 = vsel %vm469, %v505, %v506
      %v508 = vrot.slane %v315, 2
      %v509 = vsel %vm469, %v506, %v508
      %v510 = vrot.slane %v316, 2
      %v511 = vrot.slane %v317, 2
      %v512 = vsel %vm469, %v510, %v511
      %v513 = vrot.slane %v318, 2
      %v514 = vsel %vm469, %v511, %v513
      %v515 = vrot.slane %v319, 2
      %v516 = vrot.slane %v320, 2
      %v517 = vsel %vm469, %v515, %v516
      %v518 = vrot.slane %v321, 2
      %v519 = vsel %vm469, %v516, %v518
      %v520 = vrot.slane %v322, 2
      %v521 = vrot.slane %v323, 2
      %v522 = vsel %vm469, %v520, %v521
      %v523 = vrot.slane %v324, 2
      %v524 = vsel %vm469, %v521, %v523
      %v525 = vrot.slane %v325, 2
      %v526 = vrot.slane %v326, 2
      %v527 = vsel %vm469, %v525, %v526
      %v528 = vrot.slane %v327, 2
      %v529 = vsel %vm469, %v526, %v528
      %v530 = vrot.slane %v328, 2
      %v531 = vrot.slane %v329, 2
      %v532 = vsel %vm469, %v530, %v531
      %v533 = vrot.slane %v330, 2
      %v534 = vsel %vm469, %v531, %v533
      %v535 = vrot.slane %v331, 2
      %v536 = vrot.slane %v332, 2
      %v537 = vsel %vm469, %v535, %v536
      %v538 = vrot.slane %v333, 2
      %v539 = vsel %vm469, %v536, %v538
      %v540 = vrot.slane %v334, 2
      %v541 = vrot.slane %v335, 2
      %v542 = vsel %vm469, %v540, %v541
      %v543 = vrot.slane %v336, 2
      %v544 = vsel %vm469, %v541, %v543
      %v545 = vrot.slane %v337, 2
      %v546 = vrot.slane %v338, 2
      %v547 = vsel %vm469, %v545, %v546
      %v548 = vrot.slane %v339, 2
      %v549 = vsel %vm469, %v546, %v548
      %v550 = vld [vmem:[%s259] sm:$0xff]
      %v551 = vld [vmem:[%s259 + $0x8] sm:$0xff]
      %v552 = vld [vmem:[%s259 + $0x10] sm:$0x3]
      %v553 = vld [vmem:[%s259 + $0x18] sm:$0xff]
      %v554 = vld [vmem:[%s259 + $0x20] sm:$0xff]
      %v555 = vld [vmem:[%s259 + $0x28] sm:$0x3]
      %v556 = vld [vmem:[%s259 + $0x30] sm:$0xff]
      %v557 = vld [vmem:[%s259 + $0x38] sm:$0xff]
      %v558 = vld [vmem:[%s259 + $0x40] sm:$0x3]
      %v559 = vld [vmem:[%s259 + $0x48] sm:$0xff]
      %v560 = vld [vmem:[%s259 + $0x50] sm:$0xff]
      %v561 = vld [vmem:[%s259 + $0x58] sm:$0x3]
      %v562 = vld [vmem:[%s259 + $0x60] sm:$0xff]
      %v563 = vld [vmem:[%s259 + $0x68] sm:$0xff]
      %v564 = vld [vmem:[%s259 + $0x70] sm:$0x3]
      %v565 = vld [vmem:[%s259 + $0x78] sm:$0xff]
      %v566 = vld [vmem:[%s259 + $0x80] sm:$0xff]
      %v567 = vld [vmem:[%s259 + $0x88] sm:$0x3]
      %v568 = vld [vmem:[%s259 + $0x90] sm:$0xff]
      %v569 = vld [vmem:[%s259 + $0x98] sm:$0xff]
      %v570 = vld [vmem:[%s259 + $0xa0] sm:$0x3]
      %v571 = vld [vmem:[%s259 + $0xa8] sm:$0xff]
      %v572 = vld [vmem:[%s259 + $0xb0] sm:$0xff]
      %v573 = vld [vmem:[%s259 + $0xb8] sm:$0x3]
      %v574 = vld [vmem:[%s259 + $0xc0] sm:$0xff]
      %v575 = vld [vmem:[%s259 + $0xc8] sm:$0xff]
      %v576 = vld [vmem:[%s259 + $0xd0] sm:$0x3]
      %v577 = vld [vmem:[%s259 + $0xd8] sm:$0xff]
      %v578 = vld [vmem:[%s259 + $0xe0] sm:$0xff]
      %v579 = vld [vmem:[%s259 + $0xe8] sm:$0x3]
      %v580 = vld [vmem:[%s259 + $0xf0] sm:$0xff]
      %v581 = vld [vmem:[%s259 + $0xf8] sm:$0xff]
      %v582 = vld [vmem:[%s259 + $0x100] sm:$0x3]
      %v583 = vld [vmem:[%s259 + $0x108] sm:$0xff]
      %v584 = vld [vmem:[%s259 + $0x110] sm:$0xff]
      %v585 = vld [vmem:[%s259 + $0x118] sm:$0x3]
      %v586 = vld [vmem:[%s259 + $0x120] sm:$0xff]
      %v587 = vld [vmem:[%s259 + $0x128] sm:$0xff]
      %v588 = vld [vmem:[%s259 + $0x130] sm:$0x3]
      %v589 = vld [vmem:[%s259 + $0x138] sm:$0xff]
      %v590 = vld [vmem:[%s259 + $0x140] sm:$0xff]
      %v591 = vld [vmem:[%s259 + $0x148] sm:$0x3]
      %v592 = vld [vmem:[%s259 + $0x150] sm:$0xff]
      %v593 = vld [vmem:[%s259 + $0x158] sm:$0xff]
      %v594 = vld [vmem:[%s259 + $0x160] sm:$0x3]
      %v595 = vld [vmem:[%s259 + $0x168] sm:$0xff]
      %v596 = vld [vmem:[%s259 + $0x170] sm:$0xff]
      %v597 = vld [vmem:[%s259 + $0x178] sm:$0x3]
      %v646 = vrot.slane %v550, 1
      %v647 = vrot.slane %v551, 1
      %v648 = vsel %vm388, %v646, %v647
      %v649 = vrot.slane %v552, 1
      %v650 = vsel %vm388, %v647, %v649
      %v651 = vrot.slane %v553, 1
      %v652 = vrot.slane %v554, 1
      %v653 = vsel %vm388, %v651, %v652
      %v654 = vrot.slane %v555, 1
      %v655 = vsel %vm388, %v652, %v654
      %v656 = vrot.slane %v556, 1
      %v657 = vrot.slane %v557, 1
      %v658 = vsel %vm388, %v656, %v657
      %v659 = vrot.slane %v558, 1
      %v660 = vsel %vm388, %v657, %v659
      %v661 = vrot.slane %v559, 1
      %v662 = vrot.slane %v560, 1
      %v663 = vsel %vm388, %v661, %v662
      %v664 = vrot.slane %v561, 1
      %v665 = vsel %vm388, %v662, %v664
      %v666 = vrot.slane %v562, 1
      %v667 = vrot.slane %v563, 1
      %v668 = vsel %vm388, %v666, %v667
      %v669 = vrot.slane %v564, 1
      %v670 = vsel %vm388, %v667, %v669
      %v671 = vrot.slane %v565, 1
      %v672 = vrot.slane %v566, 1
      %v673 = vsel %vm388, %v671, %v672
      %v674 = vrot.slane %v567, 1
      %v675 = vsel %vm388, %v672, %v674
      %v676 = vrot.slane %v568, 1
      %v677 = vrot.slane %v569, 1
      %v678 = vsel %vm388, %v676, %v677
      %v679 = vrot.slane %v570, 1
      %v680 = vsel %vm388, %v677, %v679
      %v681 = vrot.slane %v571, 1
      %v682 = vrot.slane %v572, 1
      %v683 = vsel %vm388, %v681, %v682
      %v684 = vrot.slane %v573, 1
      %v685 = vsel %vm388, %v682, %v684
      %v686 = vrot.slane %v574, 1
      %v687 = vrot.slane %v575, 1
      %v688 = vsel %vm388, %v686, %v687
      %v689 = vrot.slane %v576, 1
      %v690 = vsel %vm388, %v687, %v689
      %v691 = vrot.slane %v577, 1
      %v692 = vrot.slane %v578, 1
      %v693 = vsel %vm388, %v691, %v692
      %v694 = vrot.slane %v579, 1
      %v695 = vsel %vm388, %v692, %v694
      %v696 = vrot.slane %v580, 1
      %v697 = vrot.slane %v581, 1
      %v698 = vsel %vm388, %v696, %v697
      %v699 = vrot.slane %v582, 1
      %v700 = vsel %vm388, %v697, %v699
      %v701 = vrot.slane %v583, 1
      %v702 = vrot.slane %v584, 1
      %v703 = vsel %vm388, %v701, %v702
      %v704 = vrot.slane %v585, 1
      %v705 = vsel %vm388, %v702, %v704
      %v706 = vrot.slane %v586, 1
      %v707 = vrot.slane %v587, 1
      %v708 = vsel %vm388, %v706, %v707
      %v709 = vrot.slane %v588, 1
      %v710 = vsel %vm388, %v707, %v709
      %v711 = vrot.slane %v589, 1
      %v712 = vrot.slane %v590, 1
      %v713 = vsel %vm388, %v711, %v712
      %v714 = vrot.slane %v591, 1
      %v715 = vsel %vm388, %v712, %v714
      %v716 = vrot.slane %v592, 1
      %v717 = vrot.slane %v593, 1
      %v718 = vsel %vm388, %v716, %v717
      %v719 = vrot.slane %v594, 1
      %v720 = vsel %vm388, %v717, %v719
      %v721 = vrot.slane %v595, 1
      %v722 = vrot.slane %v596, 1
      %v723 = vsel %vm388, %v721, %v722
      %v724 = vrot.slane %v597, 1
      %v725 = vsel %vm388, %v722, %v724
      %v726 = vrot.slane %v550, 2
      %v727 = vrot.slane %v551, 2
      %v728 = vsel %vm469, %v726, %v727
      %v729 = vrot.slane %v552, 2
      %v730 = vsel %vm469, %v727, %v729
      %v731 = vrot.slane %v553, 2
      %v732 = vrot.slane %v554, 2
      %v733 = vsel %vm469, %v731, %v732
      %v734 = vrot.slane %v555, 2
      %v735 = vsel %vm469, %v732, %v734
      %v736 = vrot.slane %v556, 2
      %v737 = vrot.slane %v557, 2
      %v738 = vsel %vm469, %v736, %v737
      %v739 = vrot.slane %v558, 2
      %v740 = vsel %vm469, %v737, %v739
      %v741 = vrot.slane %v559, 2
      %v742 = vrot.slane %v560, 2
      %v743 = vsel %vm469, %v741, %v742
      %v744 = vrot.slane %v561, 2
      %v745 = vsel %vm469, %v742, %v744
      %v746 = vrot.slane %v562, 2
      %v747 = vrot.slane %v563, 2
      %v748 = vsel %vm469, %v746, %v747
      %v749 = vrot.slane %v564, 2
      %v750 = vsel %vm469, %v747, %v749
      %v751 = vrot.slane %v565, 2
      %v752 = vrot.slane %v566, 2
      %v753 = vsel %vm469, %v751, %v752
      %v754 = vrot.slane %v567, 2
      %v755 = vsel %vm469, %v752, %v754
      %v756 = vrot.slane %v568, 2
      %v757 = vrot.slane %v569, 2
      %v758 = vsel %vm469, %v756, %v757
      %v759 = vrot.slane %v570, 2
      %v760 = vsel %vm469, %v757, %v759
      %v761 = vrot.slane %v571, 2
      %v762 = vrot.slane %v572, 2
      %v763 = vsel %vm469, %v761, %v762
      %v764 = vrot.slane %v573, 2
      %v765 = vsel %vm469, %v762, %v764
      %v766 = vrot.slane %v574, 2
      %v767 = vrot.slane %v575, 2
      %v768 = vsel %vm469, %v766, %v767
      %v769 = vrot.slane %v576, 2
      %v770 = vsel %vm469, %v767, %v769
      %v771 = vrot.slane %v577, 2
      %v772 = vrot.slane %v578, 2
      %v773 = vsel %vm469, %v771, %v772
      %v774 = vrot.slane %v579, 2
      %v775 = vsel %vm469, %v772, %v774
      %v776 = vrot.slane %v580, 2
      %v777 = vrot.slane %v581, 2
      %v778 = vsel %vm469, %v776, %v777
      %v779 = vrot.slane %v582, 2
      %v780 = vsel %vm469, %v777, %v779
      %v781 = vrot.slane %v583, 2
      %v782 = vrot.slane %v584, 2
      %v783 = vsel %vm469, %v781, %v782
      %v784 = vrot.slane %v585, 2
      %v785 = vsel %vm469, %v782, %v784
      %v786 = vrot.slane %v586, 2
      %v787 = vrot.slane %v587, 2
      %v788 = vsel %vm469, %v786, %v787
      %v789 = vrot.slane %v588, 2
      %v790 = vsel %vm469, %v787, %v789
      %v791 = vrot.slane %v589, 2
      %v792 = vrot.slane %v590, 2
      %v793 = vsel %vm469, %v791, %v792
      %v794 = vrot.slane %v591, 2
      %v795 = vsel %vm469, %v792, %v794
      %v796 = vrot.slane %v592, 2
      %v797 = vrot.slane %v593, 2
      %v798 = vsel %vm469, %v796, %v797
      %v799 = vrot.slane %v594, 2
      %v800 = vsel %vm469, %v797, %v799
      %v801 = vrot.slane %v595, 2
      %v802 = vrot.slane %v596, 2
      %v803 = vsel %vm469, %v801, %v802
      %v804 = vrot.slane %v597, 2
      %v805 = vsel %vm469, %v802, %v804
      %s806 = scalar_lea.vmem [#allocation2], 48
      %v807 = vld [vmem:[%s806] sm:$0xff]
      %v808 = vld [vmem:[%s806 + $0x8] sm:$0xff]
      %v809 = vld [vmem:[%s806 + $0x10] sm:$0x3]
      %v810 = vld [vmem:[%s806 + $0x18] sm:$0xff]
      %v811 = vld [vmem:[%s806 + $0x20] sm:$0xff]
      %v812 = vld [vmem:[%s806 + $0x28] sm:$0x3]
      %v813 = vld [vmem:[%s806 + $0x30] sm:$0xff]
      %v814 = vld [vmem:[%s806 + $0x38] sm:$0xff]
      %v815 = vld [vmem:[%s806 + $0x40] sm:$0x3]
      %v816 = vld [vmem:[%s806 + $0x48] sm:$0xff]
      %v817 = vld [vmem:[%s806 + $0x50] sm:$0xff]
      %v818 = vld [vmem:[%s806 + $0x58] sm:$0x3]
      %v819 = vld [vmem:[%s806 + $0x60] sm:$0xff]
      %v820 = vld [vmem:[%s806 + $0x68] sm:$0xff]
      %v821 = vld [vmem:[%s806 + $0x70] sm:$0x3]
      %v822 = vld [vmem:[%s806 + $0x78] sm:$0xff]
      %v823 = vld [vmem:[%s806 + $0x80] sm:$0xff]
      %v824 = vld [vmem:[%s806 + $0x88] sm:$0x3]
      %v825 = vld [vmem:[%s806 + $0x90] sm:$0xff]
      %v826 = vld [vmem:[%s806 + $0x98] sm:$0xff]
      %v827 = vld [vmem:[%s806 + $0xa0] sm:$0x3]
      %v828 = vld [vmem:[%s806 + $0xa8] sm:$0xff]
      %v829 = vld [vmem:[%s806 + $0xb0] sm:$0xff]
      %v830 = vld [vmem:[%s806 + $0xb8] sm:$0x3]
      %v831 = vld [vmem:[%s806 + $0xc0] sm:$0xff]
      %v832 = vld [vmem:[%s806 + $0xc8] sm:$0xff]
      %v833 = vld [vmem:[%s806 + $0xd0] sm:$0x3]
      %v834 = vld [vmem:[%s806 + $0xd8] sm:$0xff]
      %v835 = vld [vmem:[%s806 + $0xe0] sm:$0xff]
      %v836 = vld [vmem:[%s806 + $0xe8] sm:$0x3]
      %v837 = vld [vmem:[%s806 + $0xf0] sm:$0xff]
      %v838 = vld [vmem:[%s806 + $0xf8] sm:$0xff]
      %v839 = vld [vmem:[%s806 + $0x100] sm:$0x3]
      %v840 = vld [vmem:[%s806 + $0x108] sm:$0xff]
      %v841 = vld [vmem:[%s806 + $0x110] sm:$0xff]
      %v842 = vld [vmem:[%s806 + $0x118] sm:$0x3]
      %v843 = vld [vmem:[%s806 + $0x120] sm:$0xff]
      %v844 = vld [vmem:[%s806 + $0x128] sm:$0xff]
      %v845 = vld [vmem:[%s806 + $0x130] sm:$0x3]
      %v846 = vld [vmem:[%s806 + $0x138] sm:$0xff]
      %v847 = vld [vmem:[%s806 + $0x140] sm:$0xff]
      %v848 = vld [vmem:[%s806 + $0x148] sm:$0x3]
      %v849 = vld [vmem:[%s806 + $0x150] sm:$0xff]
      %v850 = vld [vmem:[%s806 + $0x158] sm:$0xff]
      %v851 = vld [vmem:[%s806 + $0x160] sm:$0x3]
      %v852 = vld [vmem:[%s806 + $0x168] sm:$0xff]
      %v853 = vld [vmem:[%s806 + $0x170] sm:$0xff]
      %v854 = vld [vmem:[%s806 + $0x178] sm:$0x3]
      %v903 = vrot.slane %v807, 1
      %v904 = vrot.slane %v808, 1
      %v905 = vsel %vm388, %v903, %v904
      %v906 = vrot.slane %v809, 1
      %v907 = vsel %vm388, %v904, %v906
      %v908 = vrot.slane %v810, 1
      %v909 = vrot.slane %v811, 1
      %v910 = vsel %vm388, %v908, %v909
      %v911 = vrot.slane %v812, 1
      %v912 = vsel %vm388, %v909, %v911
      %v913 = vrot.slane %v813, 1
      %v914 = vrot.slane %v814, 1
      %v915 = vsel %vm388, %v913, %v914
      %v916 = vrot.slane %v815, 1
      %v917 = vsel %vm388, %v914, %v916
      %v918 = vrot.slane %v816, 1
      %v919 = vrot.slane %v817, 1
      %v920 = vsel %vm388, %v918, %v919
      %v921 = vrot.slane %v818, 1
      %v922 = vsel %vm388, %v919, %v921
      %v923 = vrot.slane %v819, 1
      %v924 = vrot.slane %v820, 1
      %v925 = vsel %vm388, %v923, %v924
      %v926 = vrot.slane %v821, 1
      %v927 = vsel %vm388, %v924, %v926
      %v928 = vrot.slane %v822, 1
      %v929 = vrot.slane %v823, 1
      %v930 = vsel %vm388, %v928, %v929
      %v931 = vrot.slane %v824, 1
      %v932 = vsel %vm388, %v929, %v931
      %v933 = vrot.slane %v825, 1
      %v934 = vrot.slane %v826, 1
      %v935 = vsel %vm388, %v933, %v934
      %v936 = vrot.slane %v827, 1
      %v937 = vsel %vm388, %v934, %v936
      %v938 = vrot.slane %v828, 1
      %v939 = vrot.slane %v829, 1
      %v940 = vsel %vm388, %v938, %v939
      %v941 = vrot.slane %v830, 1
      %v942 = vsel %vm388, %v939, %v941
      %v943 = vrot.slane %v831, 1
      %v944 = vrot.slane %v832, 1
      %v945 = vsel %vm388, %v943, %v944
      %v946 = vrot.slane %v833, 1
      %v947 = vsel %vm388, %v944, %v946
      %v948 = vrot.slane %v834, 1
      %v949 = vrot.slane %v835, 1
      %v950 = vsel %vm388, %v948, %v949
      %v951 = vrot.slane %v836, 1
      %v952 = vsel %vm388, %v949, %v951
      %v953 = vrot.slane %v837, 1
      %v954 = vrot.slane %v838, 1
      %v955 = vsel %vm388, %v953, %v954
      %v956 = vrot.slane %v839, 1
      %v957 = vsel %vm388, %v954, %v956
      %v958 = vrot.slane %v840, 1
      %v959 = vrot.slane %v841, 1
      %v960 = vsel %vm388, %v958, %v959
      %v961 = vrot.slane %v842, 1
      %v962 = vsel %vm388, %v959, %v961
      %v963 = vrot.slane %v843, 1
      %v964 = vrot.slane %v844, 1
      %v965 = vsel %vm388, %v963, %v964
      %v966 = vrot.slane %v845, 1
      %v967 = vsel %vm388, %v964, %v966
      %v968 = vrot.slane %v846, 1
      %v969 = vrot.slane %v847, 1
      %v970 = vsel %vm388, %v968, %v969
      %v971 = vrot.slane %v848, 1
      %v972 = vsel %vm388, %v969, %v971
      %v973 = vrot.slane %v849, 1
      %v974 = vrot.slane %v850, 1
      %v975 = vsel %vm388, %v973, %v974
      %v976 = vrot.slane %v851, 1
      %v977 = vsel %vm388, %v974, %v976
      %v978 = vrot.slane %v852, 1
      %v979 = vrot.slane %v853, 1
      %v980 = vsel %vm388, %v978, %v979
      %v981 = vrot.slane %v854, 1
      %v982 = vsel %vm388, %v979, %v981
      %v983 = vrot.slane %v807, 2
      %v984 = vrot.slane %v808, 2
      %v985 = vsel %vm469, %v983, %v984
      %v986 = vrot.slane %v809, 2
      %v987 = vsel %vm469, %v984, %v986
      %v988 = vrot.slane %v810, 2
      %v989 = vrot.slane %v811, 2
      %v990 = vsel %vm469, %v988, %v989
      %v991 = vrot.slane %v812, 2
      %v992 = vsel %vm469, %v989, %v991
      %v993 = vrot.slane %v813, 2
      %v994 = vrot.slane %v814, 2
      %v995 = vsel %vm469, %v993, %v994
      %v996 = vrot.slane %v815, 2
      %v997 = vsel %vm469, %v994, %v996
      %v998 = vrot.slane %v816, 2
      %v999 = vrot.slane %v817, 2
      %v1000 = vsel %vm469, %v998, %v999
      %v1001 = vrot.slane %v818, 2
      %v1002 = vsel %vm469, %v999, %v1001
      %v1003 = vrot.slane %v819, 2
      %v1004 = vrot.slane %v820, 2
      %v1005 = vsel %vm469, %v1003, %v1004
      %v1006 = vrot.slane %v821, 2
      %v1007 = vsel %vm469, %v1004, %v1006
      %v1008 = vrot.slane %v822, 2
      %v1009 = vrot.slane %v823, 2
      %v1010 = vsel %vm469, %v1008, %v1009
      %v1011 = vrot.slane %v824, 2
      %v1012 = vsel %vm469, %v1009, %v1011
      %v1013 = vrot.slane %v825, 2
      %v1014 = vrot.slane %v826, 2
      %v1015 = vsel %vm469, %v1013, %v1014
      %v1016 = vrot.slane %v827, 2
      %v1017 = vsel %vm469, %v1014, %v1016
      %v1018 = vrot.slane %v828, 2
      %v1019 = vrot.slane %v829, 2
      %v1020 = vsel %vm469, %v1018, %v1019
      %v1021 = vrot.slane %v830, 2
      %v1022 = vsel %vm469, %v1019, %v1021
      %v1023 = vrot.slane %v831, 2
      %v1024 = vrot.slane %v832, 2
      %v1025 = vsel %vm469, %v1023, %v1024
      %v1026 = vrot.slane %v833, 2
      %v1027 = vsel %vm469, %v1024, %v1026
      %v1028 = vrot.slane %v834, 2
      %v1029 = vrot.slane %v835, 2
      %v1030 = vsel %vm469, %v1028, %v1029
      %v1031 = vrot.slane %v836, 2
      %v1032 = vsel %vm469, %v1029, %v1031
      %v1033 = vrot.slane %v837, 2
      %v1034 = vrot.slane %v838, 2
      %v1035 = vsel %vm469, %v1033, %v1034
      %v1036 = vrot.slane %v839, 2
      %v1037 = vsel %vm469, %v1034, %v1036
      %v1038 = vrot.slane %v840, 2
      %v1039 = vrot.slane %v841, 2
      %v1040 = vsel %vm469, %v1038, %v1039
      %v1041 = vrot.slane %v842, 2
      %v1042 = vsel %vm469, %v1039, %v1041
      %v1043 = vrot.slane %v843, 2
      %v1044 = vrot.slane %v844, 2
      %v1045 = vsel %vm469, %v1043, %v1044
      %v1046 = vrot.slane %v845, 2
      %v1047 = vsel %vm469, %v1044, %v1046
      %v1048 = vrot.slane %v846, 2
      %v1049 = vrot.slane %v847, 2
      %v1050 = vsel %vm469, %v1048, %v1049
      %v1051 = vrot.slane %v848, 2
      %v1052 = vsel %vm469, %v1049, %v1051
      %v1053 = vrot.slane %v849, 2
      %v1054 = vrot.slane %v850, 2
      %v1055 = vsel %vm469, %v1053, %v1054
      %v1056 = vrot.slane %v851, 2
      %v1057 = vsel %vm469, %v1054, %v1056
      %v1058 = vrot.slane %v852, 2
      %v1059 = vrot.slane %v853, 2
      %v1060 = vsel %vm469, %v1058, %v1059
      %v1061 = vrot.slane %v854, 2
      %v1062 = vsel %vm469, %v1059, %v1061
      %1063 = vrot.lane.b32.xlu0 %v391, 4
      %v1064 = vpop.permute.xlu0 %1063
      %1065 = vrot.lane.b32.xlu0 %v393, 4
      %v1066 = vpop.permute.xlu0 %1065
      %1067 = vrot.lane.b32.xlu0 %v396, 4
      %v1068 = vpop.permute.xlu0 %1067
      %1069 = vrot.lane.b32.xlu0 %v398, 4
      %v1070 = vpop.permute.xlu0 %1069
      %1071 = vrot.lane.b32.xlu0 %v401, 4
      %v1072 = vpop.permute.xlu0 %1071
      %1073 = vrot.lane.b32.xlu0 %v403, 4
      %v1074 = vpop.permute.xlu0 %1073
      %1075 = vrot.lane.b32.xlu0 %v406, 4
      %v1076 = vpop.permute.xlu0 %1075
      %1077 = vrot.lane.b32.xlu0 %v408, 4
      %v1078 = vpop.permute.xlu0 %1077
      %1079 = vrot.lane.b32.xlu0 %v411, 4
      %v1080 = vpop.permute.xlu0 %1079
      %1081 = vrot.lane.b32.xlu0 %v413, 4
      %v1082 = vpop.permute.xlu0 %1081
      %1083 = vrot.lane.b32.xlu0 %v416, 4
      %v1084 = vpop.permute.xlu0 %1083
      %1085 = vrot.lane.b32.xlu0 %v418, 4
      %v1086 = vpop.permute.xlu0 %1085
      %1087 = vrot.lane.b32.xlu0 %v421, 4
      %v1088 = vpop.permute.xlu0 %1087
      %1089 = vrot.lane.b32.xlu0 %v423, 4
      %v1090 = vpop.permute.xlu0 %1089
      %1091 = vrot.lane.b32.xlu0 %v426, 4
      %v1092 = vpop.permute.xlu0 %1091
      %1093 = vrot.lane.b32.xlu0 %v428, 4
      %v1094 = vpop.permute.xlu0 %1093
      %1095 = vrot.lane.b32.xlu0 %v431, 4
      %v1096 = vpop.permute.xlu0 %1095
      %1097 = vrot.lane.b32.xlu0 %v433, 4
      %v1098 = vpop.permute.xlu0 %1097
      %1099 = vrot.lane.b32.xlu0 %v436, 4
      %v1100 = vpop.permute.xlu0 %1099
      %1101 = vrot.lane.b32.xlu0 %v438, 4
      %v1102 = vpop.permute.xlu0 %1101
      %1103 = vrot.lane.b32.xlu0 %v441, 4
      %v1104 = vpop.permute.xlu0 %1103
      %1105 = vrot.lane.b32.xlu0 %v443, 4
      %v1106 = vpop.permute.xlu0 %1105
      %1107 = vrot.lane.b32.xlu0 %v446, 4
      %v1108 = vpop.permute.xlu0 %1107
      %1109 = vrot.lane.b32.xlu0 %v448, 4
      %v1110 = vpop.permute.xlu0 %1109
      %1111 = vrot.lane.b32.xlu0 %v451, 4
      %v1112 = vpop.permute.xlu0 %1111
      %1113 = vrot.lane.b32.xlu0 %v453, 4
      %v1114 = vpop.permute.xlu0 %1113
      %1115 = vrot.lane.b32.xlu0 %v456, 4
      %v1116 = vpop.permute.xlu0 %1115
      %1117 = vrot.lane.b32.xlu0 %v458, 4
      %v1118 = vpop.permute.xlu0 %1117
      %1119 = vrot.lane.b32.xlu0 %v461, 4
      %v1120 = vpop.permute.xlu0 %1119
      %1121 = vrot.lane.b32.xlu0 %v463, 4
      %v1122 = vpop.permute.xlu0 %1121
      %1123 = vrot.lane.b32.xlu0 %v466, 4
      %v1124 = vpop.permute.xlu0 %1123
      %1125 = vrot.lane.b32.xlu0 %v468, 4
      %v1126 = vpop.permute.xlu0 %1125
      %1159 = vrot.lane.b32.xlu0 %v472, 8
      %v1160 = vpop.permute.xlu0 %1159
      %1161 = vrot.lane.b32.xlu0 %v474, 8
      %v1162 = vpop.permute.xlu0 %1161
      %1163 = vrot.lane.b32.xlu0 %v477, 8
      %v1164 = vpop.permute.xlu0 %1163
      %1165 = vrot.lane.b32.xlu0 %v479, 8
      %v1166 = vpop.permute.xlu0 %1165
      %1167 = vrot.lane.b32.xlu0 %v482, 8
      %v1168 = vpop.permute.xlu0 %1167
      %1169 = vrot.lane.b32.xlu0 %v484, 8
      %v1170 = vpop.permute.xlu0 %1169
      %1171 = vrot.lane.b32.xlu0 %v487, 8
      %v1172 = vpop.permute.xlu0 %1171
      %1173 = vrot.lane.b32.xlu0 %v489, 8
      %v1174 = vpop.permute.xlu0 %1173
      %1175 = vrot.lane.b32.xlu0 %v492, 8
      %v1176 = vpop.permute.xlu0 %1175
      %1177 = vrot.lane.b32.xlu0 %v494, 8
      %v1178 = vpop.permute.xlu0 %1177
      %1179 = vrot.lane.b32.xlu0 %v497, 8
      %v1180 = vpop.permute.xlu0 %1179
      %1181 = vrot.lane.b32.xlu0 %v499, 8
      %v1182 = vpop.permute.xlu0 %1181
      %1183 = vrot.lane.b32.xlu0 %v502, 8
      %v1184 = vpop.permute.xlu0 %1183
      %1185 = vrot.lane.b32.xlu0 %v504, 8
      %v1186 = vpop.permute.xlu0 %1185
      %1187 = vrot.lane.b32.xlu0 %v507, 8
      %v1188 = vpop.permute.xlu0 %1187
      %1189 = vrot.lane.b32.xlu0 %v509, 8
      %v1190 = vpop.permute.xlu0 %1189
      %1191 = vrot.lane.b32.xlu0 %v512, 8
      %v1192 = vpop.permute.xlu0 %1191
      %1193 = vrot.lane.b32.xlu0 %v514, 8
      %v1194 = vpop.permute.xlu0 %1193
      %1195 = vrot.lane.b32.xlu0 %v517, 8
      %v1196 = vpop.permute.xlu0 %1195
      %1197 = vrot.lane.b32.xlu0 %v519, 8
      %v1198 = vpop.permute.xlu0 %1197
      %1199 = vrot.lane.b32.xlu0 %v522, 8
      %v1200 = vpop.permute.xlu0 %1199
      %1201 = vrot.lane.b32.xlu0 %v524, 8
      %v1202 = vpop.permute.xlu0 %1201
      %1203 = vrot.lane.b32.xlu0 %v527, 8
      %v1204 = vpop.permute.xlu0 %1203
      %1205 = vrot.lane.b32.xlu0 %v529, 8
      %v1206 = vpop.permute.xlu0 %1205
      %1207 = vrot.lane.b32.xlu0 %v532, 8
      %v1208 = vpop.permute.xlu0 %1207
      %1209 = vrot.lane.b32.xlu0 %v534, 8
      %v1210 = vpop.permute.xlu0 %1209
      %1211 = vrot.lane.b32.xlu0 %v537, 8
      %v1212 = vpop.permute.xlu0 %1211
      %1213 = vrot.lane.b32.xlu0 %v539, 8
      %v1214 = vpop.permute.xlu0 %1213
      %1215 = vrot.lane.b32.xlu0 %v542, 8
      %v1216 = vpop.permute.xlu0 %1215
      %1217 = vrot.lane.b32.xlu0 %v544, 8
      %v1218 = vpop.permute.xlu0 %1217
      %1219 = vrot.lane.b32.xlu0 %v547, 8
      %v1220 = vpop.permute.xlu0 %1219
      %1221 = vrot.lane.b32.xlu0 %v549, 8
      %v1222 = vpop.permute.xlu0 %1221
      %1255 = vrot.lane.b32.xlu0 %v550, 12
      %v1256 = vpop.permute.xlu0 %1255
      %1257 = vrot.lane.b32.xlu0 %v551, 12
      %v1258 = vpop.permute.xlu0 %1257
      %1259 = vrot.lane.b32.xlu0 %v553, 12
      %v1260 = vpop.permute.xlu0 %1259
      %1261 = vrot.lane.b32.xlu0 %v554, 12
      %v1262 = vpop.permute.xlu0 %1261
      %1263 = vrot.lane.b32.xlu0 %v556, 12
      %v1264 = vpop.permute.xlu0 %1263
      %1265 = vrot.lane.b32.xlu0 %v557, 12
      %v1266 = vpop.permute.xlu0 %1265
      %1267 = vrot.lane.b32.xlu0 %v559, 12
      %v1268 = vpop.permute.xlu0 %1267
      %1269 = vrot.lane.b32.xlu0 %v560, 12
      %v1270 = vpop.permute.xlu0 %1269
      %1271 = vrot.lane.b32.xlu0 %v562, 12
      %v1272 = vpop.permute.xlu0 %1271
      %1273 = vrot.lane.b32.xlu0 %v563, 12
      %v1274 = vpop.permute.xlu0 %1273
      %1275 = vrot.lane.b32.xlu0 %v565, 12
      %v1276 = vpop.permute.xlu0 %1275
      %1277 = vrot.lane.b32.xlu0 %v566, 12
      %v1278 = vpop.permute.xlu0 %1277
      %1279 = vrot.lane.b32.xlu0 %v568, 12
      %v1280 = vpop.permute.xlu0 %1279
      %1281 = vrot.lane.b32.xlu0 %v569, 12
      %v1282 = vpop.permute.xlu0 %1281
      %1283 = vrot.lane.b32.xlu0 %v571, 12
      %v1284 = vpop.permute.xlu0 %1283
      %1285 = vrot.lane.b32.xlu0 %v572, 12
      %v1286 = vpop.permute.xlu0 %1285
      %1287 = vrot.lane.b32.xlu0 %v574, 12
      %v1288 = vpop.permute.xlu0 %1287
      %1289 = vrot.lane.b32.xlu0 %v575, 12
      %v1290 = vpop.permute.xlu0 %1289
      %1291 = vrot.lane.b32.xlu0 %v577, 12
      %v1292 = vpop.permute.xlu0 %1291
      %1293 = vrot.lane.b32.xlu0 %v578, 12
      %v1294 = vpop.permute.xlu0 %1293
      %1295 = vrot.lane.b32.xlu0 %v580, 12
      %v1296 = vpop.permute.xlu0 %1295
      %1297 = vrot.lane.b32.xlu0 %v581, 12
      %v1298 = vpop.permute.xlu0 %1297
      %1299 = vrot.lane.b32.xlu0 %v583, 12
      %v1300 = vpop.permute.xlu0 %1299
      %1301 = vrot.lane.b32.xlu0 %v584, 12
      %v1302 = vpop.permute.xlu0 %1301
      %1303 = vrot.lane.b32.xlu0 %v586, 12
      %v1304 = vpop.permute.xlu0 %1303
      %1305 = vrot.lane.b32.xlu0 %v587, 12
      %v1306 = vpop.permute.xlu0 %1305
      %1307 = vrot.lane.b32.xlu0 %v589, 12
      %v1308 = vpop.permute.xlu0 %1307
      %1309 = vrot.lane.b32.xlu0 %v590, 12
      %v1310 = vpop.permute.xlu0 %1309
      %1311 = vrot.lane.b32.xlu0 %v592, 12
      %v1312 = vpop.permute.xlu0 %1311
      %1313 = vrot.lane.b32.xlu0 %v593, 12
      %v1314 = vpop.permute.xlu0 %1313
      %1315 = vrot.lane.b32.xlu0 %v595, 12
      %v1316 = vpop.permute.xlu0 %1315
      %1317 = vrot.lane.b32.xlu0 %v596, 12
      %v1318 = vpop.permute.xlu0 %1317
      %1351 = vrot.lane.b32.xlu0 %v648, 16
      %v1352 = vpop.permute.xlu0 %1351
      %1353 = vrot.lane.b32.xlu0 %v650, 16
      %v1354 = vpop.permute.xlu0 %1353
      %1355 = vrot.lane.b32.xlu0 %v653, 16
      %v1356 = vpop.permute.xlu0 %1355
      %1357 = vrot.lane.b32.xlu0 %v655, 16
      %v1358 = vpop.permute.xlu0 %1357
      %1359 = vrot.lane.b32.xlu0 %v658, 16
      %v1360 = vpop.permute.xlu0 %1359
      %1361 = vrot.lane.b32.xlu0 %v660, 16
      %v1362 = vpop.permute.xlu0 %1361
      %1363 = vrot.lane.b32.xlu0 %v663, 16
      %v1364 = vpop.permute.xlu0 %1363
      %1365 = vrot.lane.b32.xlu0 %v665, 16
      %v1366 = vpop.permute.xlu0 %1365
      %1367 = vrot.lane.b32.xlu0 %v668, 16
      %v1368 = vpop.permute.xlu0 %1367
      %1369 = vrot.lane.b32.xlu0 %v670, 16
      %v1370 = vpop.permute.xlu0 %1369
      %1371 = vrot.lane.b32.xlu0 %v673, 16
      %v1372 = vpop.permute.xlu0 %1371
      %1373 = vrot.lane.b32.xlu0 %v675, 16
      %v1374 = vpop.permute.xlu0 %1373
      %1375 = vrot.lane.b32.xlu0 %v678, 16
      %v1376 = vpop.permute.xlu0 %1375
      %1377 = vrot.lane.b32.xlu0 %v680, 16
      %v1378 = vpop.permute.xlu0 %1377
      %1379 = vrot.lane.b32.xlu0 %v683, 16
      %v1380 = vpop.permute.xlu0 %1379
      %1381 = vrot.lane.b32.xlu0 %v685, 16
      %v1382 = vpop.permute.xlu0 %1381
      %1383 = vrot.lane.b32.xlu0 %v688, 16
      %v1384 = vpop.permute.xlu0 %1383
      %1385 = vrot.lane.b32.xlu0 %v690, 16
      %v1386 = vpop.permute.xlu0 %1385
      %1387 = vrot.lane.b32.xlu0 %v693, 16
      %v1388 = vpop.permute.xlu0 %1387
      %1389 = vrot.lane.b32.xlu0 %v695, 16
      %v1390 = vpop.permute.xlu0 %1389
      %1391 = vrot.lane.b32.xlu0 %v698, 16
      %v1392 = vpop.permute.xlu0 %1391
      %1393 = vrot.lane.b32.xlu0 %v700, 16
      %v1394 = vpop.permute.xlu0 %1393
      %1395 = vrot.lane.b32.xlu0 %v703, 16
      %v1396 = vpop.permute.xlu0 %1395
      %1397 = vrot.lane.b32.xlu0 %v705, 16
      %v1398 = vpop.permute.xlu0 %1397
      %1399 = vrot.lane.b32.xlu0 %v708, 16
      %v1400 = vpop.permute.xlu0 %1399
      %1401 = vrot.lane.b32.xlu0 %v710, 16
      %v1402 = vpop.permute.xlu0 %1401
      %1403 = vrot.lane.b32.xlu0 %v713, 16
      %v1404 = vpop.permute.xlu0 %1403
      %1405 = vrot.lane.b32.xlu0 %v715, 16
      %v1406 = vpop.permute.xlu0 %1405
      %1407 = vrot.lane.b32.xlu0 %v718, 16
      %v1408 = vpop.permute.xlu0 %1407
      %1409 = vrot.lane.b32.xlu0 %v720, 16
      %v1410 = vpop.permute.xlu0 %1409
      %1411 = vrot.lane.b32.xlu0 %v723, 16
      %v1412 = vpop.permute.xlu0 %1411
      %1413 = vrot.lane.b32.xlu0 %v725, 16
      %v1414 = vpop.permute.xlu0 %1413
      %1447 = vrot.lane.b32.xlu0 %v728, 20
      %v1448 = vpop.permute.xlu0 %1447
      %1449 = vrot.lane.b32.xlu0 %v730, 20
      %v1450 = vpop.permute.xlu0 %1449
      %1451 = vrot.lane.b32.xlu0 %v733, 20
      %v1452 = vpop.permute.xlu0 %1451
      %1453 = vrot.lane.b32.xlu0 %v735, 20
      %v1454 = vpop.permute.xlu0 %1453
      %1455 = vrot.lane.b32.xlu0 %v738, 20
      %v1456 = vpop.permute.xlu0 %1455
      %1457 = vrot.lane.b32.xlu0 %v740, 20
      %v1458 = vpop.permute.xlu0 %1457
      %1459 = vrot.lane.b32.xlu0 %v743, 20
      %v1460 = vpop.permute.xlu0 %1459
      %1461 = vrot.lane.b32.xlu0 %v745, 20
      %v1462 = vpop.permute.xlu0 %1461
      %1463 = vrot.lane.b32.xlu0 %v748, 20
      %v1464 = vpop.permute.xlu0 %1463
      %1465 = vrot.lane.b32.xlu0 %v750, 20
      %v1466 = vpop.permute.xlu0 %1465
      %1467 = vrot.lane.b32.xlu0 %v753, 20
      %v1468 = vpop.permute.xlu0 %1467
      %1469 = vrot.lane.b32.xlu0 %v755, 20
      %v1470 = vpop.permute.xlu0 %1469
      %1471 = vrot.lane.b32.xlu0 %v758, 20
      %v1472 = vpop.permute.xlu0 %1471
      %1473 = vrot.lane.b32.xlu0 %v760, 20
      %v1474 = vpop.permute.xlu0 %1473
      %1475 = vrot.lane.b32.xlu0 %v763, 20
      %v1476 = vpop.permute.xlu0 %1475
      %1477 = vrot.lane.b32.xlu0 %v765, 20
      %v1478 = vpop.permute.xlu0 %1477
      %1479 = vrot.lane.b32.xlu0 %v768, 20
      %v1480 = vpop.permute.xlu0 %1479
      %1481 = vrot.lane.b32.xlu0 %v770, 20
      %v1482 = vpop.permute.xlu0 %1481
      %1483 = vrot.lane.b32.xlu0 %v773, 20
      %v1484 = vpop.permute.xlu0 %1483
      %1485 = vrot.lane.b32.xlu0 %v775, 20
      %v1486 = vpop.permute.xlu0 %1485
      %1487 = vrot.lane.b32.xlu0 %v778, 20
      %v1488 = vpop.permute.xlu0 %1487
      %1489 = vrot.lane.b32.xlu0 %v780, 20
      %v1490 = vpop.permute.xlu0 %1489
      %1491 = vrot.lane.b32.xlu0 %v783, 20
      %v1492 = vpop.permute.xlu0 %1491
      %1493 = vrot.lane.b32.xlu0 %v785, 20
      %v1494 = vpop.permute.xlu0 %1493
      %1495 = vrot.lane.b32.xlu0 %v788, 20
      %v1496 = vpop.permute.xlu0 %1495
      %1497 = vrot.lane.b32.xlu0 %v790, 20
      %v1498 = vpop.permute.xlu0 %1497
      %1499 = vrot.lane.b32.xlu0 %v793, 20
      %v1500 = vpop.permute.xlu0 %1499
      %1501 = vrot.lane.b32.xlu0 %v795, 20
      %v1502 = vpop.permute.xlu0 %1501
      %1503 = vrot.lane.b32.xlu0 %v798, 20
      %v1504 = vpop.permute.xlu0 %1503
      %1505 = vrot.lane.b32.xlu0 %v800, 20
      %v1506 = vpop.permute.xlu0 %1505
      %1507 = vrot.lane.b32.xlu0 %v803, 20
      %v1508 = vpop.permute.xlu0 %1507
      %1509 = vrot.lane.b32.xlu0 %v805, 20
      %v1510 = vpop.permute.xlu0 %1509
      %1543 = vrot.lane.b32.xlu0 %v807, 24
      %v1544 = vpop.permute.xlu0 %1543
      %1545 = vrot.lane.b32.xlu0 %v808, 24
      %v1546 = vpop.permute.xlu0 %1545
      %1547 = vrot.lane.b32.xlu0 %v810, 24
      %v1548 = vpop.permute.xlu0 %1547
      %1549 = vrot.lane.b32.xlu0 %v811, 24
      %v1550 = vpop.permute.xlu0 %1549
      %1551 = vrot.lane.b32.xlu0 %v813, 24
      %v1552 = vpop.permute.xlu0 %1551
      %1553 = vrot.lane.b32.xlu0 %v814, 24
      %v1554 = vpop.permute.xlu0 %1553
      %1555 = vrot.lane.b32.xlu0 %v816, 24
      %v1556 = vpop.permute.xlu0 %1555
      %1557 = vrot.lane.b32.xlu0 %v817, 24
      %v1558 = vpop.permute.xlu0 %1557
      %1559 = vrot.lane.b32.xlu0 %v819, 24
      %v1560 = vpop.permute.xlu0 %1559
      %1561 = vrot.lane.b32.xlu0 %v820, 24
      %v1562 = vpop.permute.xlu0 %1561
      %1563 = vrot.lane.b32.xlu0 %v822, 24
      %v1564 = vpop.permute.xlu0 %1563
      %1565 = vrot.lane.b32.xlu0 %v823, 24
      %v1566 = vpop.permute.xlu0 %1565
      %1567 = vrot.lane.b32.xlu0 %v825, 24
      %v1568 = vpop.permute.xlu0 %1567
      %1569 = vrot.lane.b32.xlu0 %v826, 24
      %v1570 = vpop.permute.xlu0 %1569
      %1571 = vrot.lane.b32.xlu0 %v828, 24
      %v1572 = vpop.permute.xlu0 %1571
      %1573 = vrot.lane.b32.xlu0 %v829, 24
      %v1574 = vpop.permute.xlu0 %1573
      %1575 = vrot.lane.b32.xlu0 %v831, 24
      %v1576 = vpop.permute.xlu0 %1575
      %1577 = vrot.lane.b32.xlu0 %v832, 24
      %v1578 = vpop.permute.xlu0 %1577
      %1579 = vrot.lane.b32.xlu0 %v834, 24
      %v1580 = vpop.permute.xlu0 %1579
      %1581 = vrot.lane.b32.xlu0 %v835, 24
      %v1582 = vpop.permute.xlu0 %1581
      %1583 = vrot.lane.b32.xlu0 %v837, 24
      %v1584 = vpop.permute.xlu0 %1583
      %1585 = vrot.lane.b32.xlu0 %v838, 24
      %v1586 = vpop.permute.xlu0 %1585
      %1587 = vrot.lane.b32.xlu0 %v840, 24
      %v1588 = vpop.permute.xlu0 %1587
      %1589 = vrot.lane.b32.xlu0 %v841, 24
      %v1590 = vpop.permute.xlu0 %1589
      %1591 = vrot.lane.b32.xlu0 %v843, 24
      %v1592 = vpop.permute.xlu0 %1591
      %1593 = vrot.lane.b32.xlu0 %v844, 24
      %v1594 = vpop.permute.xlu0 %1593
      %1595 = vrot.lane.b32.xlu0 %v846, 24
      %v1596 = vpop.permute.xlu0 %1595
      %1597 = vrot.lane.b32.xlu0 %v847, 24
      %v1598 = vpop.permute.xlu0 %1597
      %1599 = vrot.lane.b32.xlu0 %v849, 24
      %v1600 = vpop.permute.xlu0 %1599
      %1601 = vrot.lane.b32.xlu0 %v850, 24
      %v1602 = vpop.permute.xlu0 %1601
      %1603 = vrot.lane.b32.xlu0 %v852, 24
      %v1604 = vpop.permute.xlu0 %1603
      %1605 = vrot.lane.b32.xlu0 %v853, 24
      %v1606 = vpop.permute.xlu0 %1605
      %1639 = vrot.lane.b32.xlu0 %v905, 28
      %v1640 = vpop.permute.xlu0 %1639
      %1641 = vrot.lane.b32.xlu0 %v907, 28
      %v1642 = vpop.permute.xlu0 %1641
      %1643 = vrot.lane.b32.xlu0 %v910, 28
      %v1644 = vpop.permute.xlu0 %1643
      %1645 = vrot.lane.b32.xlu0 %v912, 28
      %v1646 = vpop.permute.xlu0 %1645
      %1647 = vrot.lane.b32.xlu0 %v915, 28
      %v1648 = vpop.permute.xlu0 %1647
      %1649 = vrot.lane.b32.xlu0 %v917, 28
      %v1650 = vpop.permute.xlu0 %1649
      %1651 = vrot.lane.b32.xlu0 %v920, 28
      %v1652 = vpop.permute.xlu0 %1651
      %1653 = vrot.lane.b32.xlu0 %v922, 28
      %v1654 = vpop.permute.xlu0 %1653
      %1655 = vrot.lane.b32.xlu0 %v925, 28
      %v1656 = vpop.permute.xlu0 %1655
      %1657 = vrot.lane.b32.xlu0 %v927, 28
      %v1658 = vpop.permute.xlu0 %1657
      %1659 = vrot.lane.b32.xlu0 %v930, 28
      %v1660 = vpop.permute.xlu0 %1659
      %1661 = vrot.lane.b32.xlu0 %v932, 28
      %v1662 = vpop.permute.xlu0 %1661
      %1663 = vrot.lane.b32.xlu0 %v935, 28
      %v1664 = vpop.permute.xlu0 %1663
      %1665 = vrot.lane.b32.xlu0 %v937, 28
      %v1666 = vpop.permute.xlu0 %1665
      %1667 = vrot.lane.b32.xlu0 %v940, 28
      %v1668 = vpop.permute.xlu0 %1667
      %1669 = vrot.lane.b32.xlu0 %v942, 28
      %v1670 = vpop.permute.xlu0 %1669
      %1671 = vrot.lane.b32.xlu0 %v945, 28
      %v1672 = vpop.permute.xlu0 %1671
      %1673 = vrot.lane.b32.xlu0 %v947, 28
      %v1674 = vpop.permute.xlu0 %1673
      %1675 = vrot.lane.b32.xlu0 %v950, 28
      %v1676 = vpop.permute.xlu0 %1675
      %1677 = vrot.lane.b32.xlu0 %v952, 28
      %v1678 = vpop.permute.xlu0 %1677
      %1679 = vrot.lane.b32.xlu0 %v955, 28
      %v1680 = vpop.permute.xlu0 %1679
      %1681 = vrot.lane.b32.xlu0 %v957, 28
      %v1682 = vpop.permute.xlu0 %1681
      %1683 = vrot.lane.b32.xlu0 %v960, 28
      %v1684 = vpop.permute.xlu0 %1683
      %1685 = vrot.lane.b32.xlu0 %v962, 28
      %v1686 = vpop.permute.xlu0 %1685
      %1687 = vrot.lane.b32.xlu0 %v965, 28
      %v1688 = vpop.permute.xlu0 %1687
      %1689 = vrot.lane.b32.xlu0 %v967, 28
      %v1690 = vpop.permute.xlu0 %1689
      %1691 = vrot.lane.b32.xlu0 %v970, 28
      %v1692 = vpop.permute.xlu0 %1691
      %1693 = vrot.lane.b32.xlu0 %v972, 28
      %v1694 = vpop.permute.xlu0 %1693
      %1695 = vrot.lane.b32.xlu0 %v975, 28
      %v1696 = vpop.permute.xlu0 %1695
      %1697 = vrot.lane.b32.xlu0 %v977, 28
      %v1698 = vpop.permute.xlu0 %1697
      %1699 = vrot.lane.b32.xlu0 %v980, 28
      %v1700 = vpop.permute.xlu0 %1699
      %1701 = vrot.lane.b32.xlu0 %v982, 28
      %v1702 = vpop.permute.xlu0 %1701
      %1735 = vrot.lane.b32.xlu0 %v985, 32
      %v1736 = vpop.permute.xlu0 %1735
      %1737 = vrot.lane.b32.xlu0 %v987, 32
      %v1738 = vpop.permute.xlu0 %1737
      %1739 = vrot.lane.b32.xlu0 %v990, 32
      %v1740 = vpop.permute.xlu0 %1739
      %1741 = vrot.lane.b32.xlu0 %v992, 32
      %v1742 = vpop.permute.xlu0 %1741
      %1743 = vrot.lane.b32.xlu0 %v995, 32
      %v1744 = vpop.permute.xlu0 %1743
      %1745 = vrot.lane.b32.xlu0 %v997, 32
      %v1746 = vpop.permute.xlu0 %1745
      %1747 = vrot.lane.b32.xlu0 %v1000, 32
      %v1748 = vpop.permute.xlu0 %1747
      %1749 = vrot.lane.b32.xlu0 %v1002, 32
      %v1750 = vpop.permute.xlu0 %1749
      %1751 = vrot.lane.b32.xlu0 %v1005, 32
      %v1752 = vpop.permute.xlu0 %1751
      %1753 = vrot.lane.b32.xlu0 %v1007, 32
      %v1754 = vpop.permute.xlu0 %1753
      %1755 = vrot.lane.b32.xlu0 %v1010, 32
      %v1756 = vpop.permute.xlu0 %1755
      %1757 = vrot.lane.b32.xlu0 %v1012, 32
      %v1758 = vpop.permute.xlu0 %1757
      %1759 = vrot.lane.b32.xlu0 %v1015, 32
      %v1760 = vpop.permute.xlu0 %1759
      %1761 = vrot.lane.b32.xlu0 %v1017, 32
      %v1762 = vpop.permute.xlu0 %1761
      %1763 = vrot.lane.b32.xlu0 %v1020, 32
      %v1764 = vpop.permute.xlu0 %1763
      %1765 = vrot.lane.b32.xlu0 %v1022, 32
      %v1766 = vpop.permute.xlu0 %1765
      %1767 = vrot.lane.b32.xlu0 %v1025, 32
      %v1768 = vpop.permute.xlu0 %1767
      %1769 = vrot.lane.b32.xlu0 %v1027, 32
      %v1770 = vpop.permute.xlu0 %1769
      %1771 = vrot.lane.b32.xlu0 %v1030, 32
      %v1772 = vpop.permute.xlu0 %1771
      %1773 = vrot.lane.b32.xlu0 %v1032, 32
      %v1774 = vpop.permute.xlu0 %1773
      %1775 = vrot.lane.b32.xlu0 %v1035, 32
      %v1776 = vpop.permute.xlu0 %1775
      %1777 = vrot.lane.b32.xlu0 %v1037, 32
      %v1778 = vpop.permute.xlu0 %1777
      %1779 = vrot.lane.b32.xlu0 %v1040, 32
      %v1780 = vpop.permute.xlu0 %1779
      %1781 = vrot.lane.b32.xlu0 %v1042, 32
      %v1782 = vpop.permute.xlu0 %1781
      %1783 = vrot.lane.b32.xlu0 %v1045, 32
      %v1784 = vpop.permute.xlu0 %1783
      %1785 = vrot.lane.b32.xlu0 %v1047, 32
      %v1786 = vpop.permute.xlu0 %1785
      %1787 = vrot.lane.b32.xlu0 %v1050, 32
      %v1788 = vpop.permute.xlu0 %1787
      %1789 = vrot.lane.b32.xlu0 %v1052, 32
      %v1790 = vpop.permute.xlu0 %1789
      %1791 = vrot.lane.b32.xlu0 %v1055, 32
      %v1792 = vpop.permute.xlu0 %1791
      %1793 = vrot.lane.b32.xlu0 %v1057, 32
      %v1794 = vpop.permute.xlu0 %1793
      %1795 = vrot.lane.b32.xlu0 %v1060, 32
      %v1796 = vpop.permute.xlu0 %1795
      %1797 = vrot.lane.b32.xlu0 %v1062, 32
      %v1798 = vpop.permute.xlu0 %1797
      %v1831 = vsel %vm203, %v292, %v1064
      %v1832 = vsel %vm203, %v293, %v1066
      %v1833 = vsel %vm203, %v295, %v1068
      %v1834 = vsel %vm203, %v296, %v1070
      %v1835 = vsel %vm203, %v298, %v1072
      %v1836 = vsel %vm203, %v299, %v1074
      %v1837 = vsel %vm203, %v301, %v1076
      %v1838 = vsel %vm203, %v302, %v1078
      %v1839 = vsel %vm203, %v304, %v1080
      %v1840 = vsel %vm203, %v305, %v1082
      %v1841 = vsel %vm203, %v307, %v1084
      %v1842 = vsel %vm203, %v308, %v1086
      %v1843 = vsel %vm203, %v310, %v1088
      %v1844 = vsel %vm203, %v311, %v1090
      %v1845 = vsel %vm203, %v313, %v1092
      %v1846 = vsel %vm203, %v314, %v1094
      %v1847 = vsel %vm203, %v316, %v1096
      %v1848 = vsel %vm203, %v317, %v1098
      %v1849 = vsel %vm203, %v319, %v1100
      %v1850 = vsel %vm203, %v320, %v1102
      %v1851 = vsel %vm203, %v322, %v1104
      %v1852 = vsel %vm203, %v323, %v1106
      %v1853 = vsel %vm203, %v325, %v1108
      %v1854 = vsel %vm203, %v326, %v1110
      %v1855 = vsel %vm203, %v328, %v1112
      %v1856 = vsel %vm203, %v329, %v1114
      %v1857 = vsel %vm203, %v331, %v1116
      %v1858 = vsel %vm203, %v332, %v1118
      %v1859 = vsel %vm203, %v334, %v1120
      %v1860 = vsel %vm203, %v335, %v1122
      %v1861 = vsel %vm203, %v337, %v1124
      %v1862 = vsel %vm203, %v338, %v1126
      %vm1863 = vcmask 64512
      %v1864 = vsel %vm1863, %v1831, %v1160
      %v1865 = vsel %vm1863, %v1832, %v1162
      %v1866 = vsel %vm1863, %v1833, %v1164
      %v1867 = vsel %vm1863, %v1834, %v1166
      %v1868 = vsel %vm1863, %v1835, %v1168
      %v1869 = vsel %vm1863, %v1836, %v1170
      %v1870 = vsel %vm1863, %v1837, %v1172
      %v1871 = vsel %vm1863, %v1838, %v1174
      %v1872 = vsel %vm1863, %v1839, %v1176
      %v1873 = vsel %vm1863, %v1840, %v1178
      %v1874 = vsel %vm1863, %v1841, %v1180
      %v1875 = vsel %vm1863, %v1842, %v1182
      %v1876 = vsel %vm1863, %v1843, %v1184
      %v1877 = vsel %vm1863, %v1844, %v1186
      %v1878 = vsel %vm1863, %v1845, %v1188
      %v1879 = vsel %vm1863, %v1846, %v1190
      %v1880 = vsel %vm1863, %v1847, %v1192
      %v1881 = vsel %vm1863, %v1848, %v1194
      %v1882 = vsel %vm1863, %v1849, %v1196
      %v1883 = vsel %vm1863, %v1850, %v1198
      %v1884 = vsel %vm1863, %v1851, %v1200
      %v1885 = vsel %vm1863, %v1852, %v1202
      %v1886 = vsel %vm1863, %v1853, %v1204
      %v1887 = vsel %vm1863, %v1854, %v1206
      %v1888 = vsel %vm1863, %v1855, %v1208
      %v1889 = vsel %vm1863, %v1856, %v1210
      %v1890 = vsel %vm1863, %v1857, %v1212
      %v1891 = vsel %vm1863, %v1858, %v1214
      %v1892 = vsel %vm1863, %v1859, %v1216
      %v1893 = vsel %vm1863, %v1860, %v1218
      %v1894 = vsel %vm1863, %v1861, %v1220
      %v1895 = vsel %vm1863, %v1862, %v1222
      %vm1896 = vcmask 97280
      %v1897 = vsel %vm1896, %v1864, %v1256
      %v1898 = vsel %vm1896, %v1865, %v1258
      %v1899 = vsel %vm1896, %v1866, %v1260
      %v1900 = vsel %vm1896, %v1867, %v1262
      %v1901 = vsel %vm1896, %v1868, %v1264
      %v1902 = vsel %vm1896, %v1869, %v1266
      %v1903 = vsel %vm1896, %v1870, %v1268
      %v1904 = vsel %vm1896, %v1871, %v1270
      %v1905 = vsel %vm1896, %v1872, %v1272
      %v1906 = vsel %vm1896, %v1873, %v1274
      %v1907 = vsel %vm1896, %v1874, %v1276
      %v1908 = vsel %vm1896, %v1875, %v1278
      %v1909 = vsel %vm1896, %v1876, %v1280
      %v1910 = vsel %vm1896, %v1877, %v1282
      %v1911 = vsel %vm1896, %v1878, %v1284
      %v1912 = vsel %vm1896, %v1879, %v1286
      %v1913 = vsel %vm1896, %v1880, %v1288
      %v1914 = vsel %vm1896, %v1881, %v1290
      %v1915 = vsel %vm1896, %v1882, %v1292
      %v1916 = vsel %vm1896, %v1883, %v1294
      %v1917 = vsel %vm1896, %v1884, %v1296
      %v1918 = vsel %vm1896, %v1885, %v1298
      %v1919 = vsel %vm1896, %v1886, %v1300
      %v1920 = vsel %vm1896, %v1887, %v1302
      %v1921 = vsel %vm1896, %v1888, %v1304
      %v1922 = vsel %vm1896, %v1889, %v1306
      %v1923 = vsel %vm1896, %v1890, %v1308
      %v1924 = vsel %vm1896, %v1891, %v1310
      %v1925 = vsel %vm1896, %v1892, %v1312
      %v1926 = vsel %vm1896, %v1893, %v1314
      %v1927 = vsel %vm1896, %v1894, %v1316
      %v1928 = vsel %vm1896, %v1895, %v1318
      %vm1929 = vcmask 130048
      %v1930 = vsel %vm1929, %v1897, %v1352
      %v1931 = vsel %vm1929, %v1898, %v1354
      %v1932 = vsel %vm1929, %v1899, %v1356
      %v1933 = vsel %vm1929, %v1900, %v1358
      %v1934 = vsel %vm1929, %v1901, %v1360
      %v1935 = vsel %vm1929, %v1902, %v1362
      %v1936 = vsel %vm1929, %v1903, %v1364
      %v1937 = vsel %vm1929, %v1904, %v1366
      %v1938 = vsel %vm1929, %v1905, %v1368
      %v1939 = vsel %vm1929, %v1906, %v1370
      %v1940 = vsel %vm1929, %v1907, %v1372
      %v1941 = vsel %vm1929, %v1908, %v1374
      %v1942 = vsel %vm1929, %v1909, %v1376
      %v1943 = vsel %vm1929, %v1910, %v1378
      %v1944 = vsel %vm1929, %v1911, %v1380
      %v1945 = vsel %vm1929, %v1912, %v1382
      %v1946 = vsel %vm1929, %v1913, %v1384
      %v1947 = vsel %vm1929, %v1914, %v1386
      %v1948 = vsel %vm1929, %v1915, %v1388
      %v1949 = vsel %vm1929, %v1916, %v1390
      %v1950 = vsel %vm1929, %v1917, %v1392
      %v1951 = vsel %vm1929, %v1918, %v1394
      %v1952 = vsel %vm1929, %v1919, %v1396
      %v1953 = vsel %vm1929, %v1920, %v1398
      %v1954 = vsel %vm1929, %v1921, %v1400
      %v1955 = vsel %vm1929, %v1922, %v1402
      %v1956 = vsel %vm1929, %v1923, %v1404
      %v1957 = vsel %vm1929, %v1924, %v1406
      %v1958 = vsel %vm1929, %v1925, %v1408
      %v1959 = vsel %vm1929, %v1926, %v1410
      %v1960 = vsel %vm1929, %v1927, %v1412
      %v1961 = vsel %vm1929, %v1928, %v1414
      %vm1962 = vcmask 162816
      %v1963 = vsel %vm1962, %v1930, %v1448
      %v1964 = vsel %vm1962, %v1931, %v1450
      %v1965 = vsel %vm1962, %v1932, %v1452
      %v1966 = vsel %vm1962, %v1933, %v1454
      %v1967 = vsel %vm1962, %v1934, %v1456
      %v1968 = vsel %vm1962, %v1935, %v1458
      %v1969 = vsel %vm1962, %v1936, %v1460
      %v1970 = vsel %vm1962, %v1937, %v1462
      %v1971 = vsel %vm1962, %v1938, %v1464
      %v1972 = vsel %vm1962, %v1939, %v1466
      %v1973 = vsel %vm1962, %v1940, %v1468
      %v1974 = vsel %vm1962, %v1941, %v1470
      %v1975 = vsel %vm1962, %v1942, %v1472
      %v1976 = vsel %vm1962, %v1943, %v1474
      %v1977 = vsel %vm1962, %v1944, %v1476
      %v1978 = vsel %vm1962, %v1945, %v1478
      %v1979 = vsel %vm1962, %v1946, %v1480
      %v1980 = vsel %vm1962, %v1947, %v1482
      %v1981 = vsel %vm1962, %v1948, %v1484
      %v1982 = vsel %vm1962, %v1949, %v1486
      %v1983 = vsel %vm1962, %v1950, %v1488
      %v1984 = vsel %vm1962, %v1951, %v1490
      %v1985 = vsel %vm1962, %v1952, %v1492
      %v1986 = vsel %vm1962, %v1953, %v1494
      %v1987 = vsel %vm1962, %v1954, %v1496
      %v1988 = vsel %vm1962, %v1955, %v1498
      %v1989 = vsel %vm1962, %v1956, %v1500
      %v1990 = vsel %vm1962, %v1957, %v1502
      %v1991 = vsel %vm1962, %v1958, %v1504
      %v1992 = vsel %vm1962, %v1959, %v1506
      %v1993 = vsel %vm1962, %v1960, %v1508
      %v1994 = vsel %vm1962, %v1961, %v1510
      %vm1995 = vcmask 195584
      %v1996 = vsel %vm1995, %v1963, %v1544
      %v1997 = vsel %vm1995, %v1964, %v1546
      %v1998 = vsel %vm1995, %v1965, %v1548
      %v1999 = vsel %vm1995, %v1966, %v1550
      %v2000 = vsel %vm1995, %v1967, %v1552
      %v2001 = vsel %vm1995, %v1968, %v1554
      %v2002 = vsel %vm1995, %v1969, %v1556
      %v2003 = vsel %vm1995, %v1970, %v1558
      %v2004 = vsel %vm1995, %v1971, %v1560
      %v2005 = vsel %vm1995, %v1972, %v1562
      %v2006 = vsel %vm1995, %v1973, %v1564
      %v2007 = vsel %vm1995, %v1974, %v1566
      %v2008 = vsel %vm1995, %v1975, %v1568
      %v2009 = vsel %vm1995, %v1976, %v1570
      %v2010 = vsel %vm1995, %v1977, %v1572
      %v2011 = vsel %vm1995, %v1978, %v1574
      %v2012 = vsel %vm1995, %v1979, %v1576
      %v2013 = vsel %vm1995, %v1980, %v1578
      %v2014 = vsel %vm1995, %v1981, %v1580
      %v2015 = vsel %vm1995, %v1982, %v1582
      %v2016 = vsel %vm1995, %v1983, %v1584
      %v2017 = vsel %vm1995, %v1984, %v1586
      %v2018 = vsel %vm1995, %v1985, %v1588
      %v2019 = vsel %vm1995, %v1986, %v1590
      %v2020 = vsel %vm1995, %v1987, %v1592
      %v2021 = vsel %vm1995, %v1988, %v1594
      %v2022 = vsel %vm1995, %v1989, %v1596
      %v2023 = vsel %vm1995, %v1990, %v1598
      %v2024 = vsel %vm1995, %v1991, %v1600
      %v2025 = vsel %vm1995, %v1992, %v1602
      %v2026 = vsel %vm1995, %v1993, %v1604
      %v2027 = vsel %vm1995, %v1994, %v1606
      %vm2028 = vcmask 228352
      %v2029 = vsel %vm2028, %v1996, %v1640
      %v2030 = vsel %vm2028, %v1997, %v1642
      %v2031 = vsel %vm2028, %v1998, %v1644
      %v2032 = vsel %vm2028, %v1999, %v1646
      %v2033 = vsel %vm2028, %v2000, %v1648
      %v2034 = vsel %vm2028, %v2001, %v1650
      %v2035 = vsel %vm2028, %v2002, %v1652
      %v2036 = vsel %vm2028, %v2003, %v1654
      %v2037 = vsel %vm2028, %v2004, %v1656
      %v2038 = vsel %vm2028, %v2005, %v1658
      %v2039 = vsel %vm2028, %v2006, %v1660
      %v2040 = vsel %vm2028, %v2007, %v1662
      %v2041 = vsel %vm2028, %v2008, %v1664
      %v2042 = vsel %vm2028, %v2009, %v1666
      %v2043 = vsel %vm2028, %v2010, %v1668
      %v2044 = vsel %vm2028, %v2011, %v1670
      %v2045 = vsel %vm2028, %v2012, %v1672
      %v2046 = vsel %vm2028, %v2013, %v1674
      %v2047 = vsel %vm2028, %v2014, %v1676
      %v2048 = vsel %vm2028, %v2015, %v1678
      %v2049 = vsel %vm2028, %v2016, %v1680
      %v2050 = vsel %vm2028, %v2017, %v1682
      %v2051 = vsel %vm2028, %v2018, %v1684
      %v2052 = vsel %vm2028, %v2019, %v1686
      %v2053 = vsel %vm2028, %v2020, %v1688
      %v2054 = vsel %vm2028, %v2021, %v1690
      %v2055 = vsel %vm2028, %v2022, %v1692
      %v2056 = vsel %vm2028, %v2023, %v1694
      %v2057 = vsel %vm2028, %v2024, %v1696
      %v2058 = vsel %vm2028, %v2025, %v1698
      %v2059 = vsel %vm2028, %v2026, %v1700
      %v2060 = vsel %vm2028, %v2027, %v1702
      %vm2061 = vcmask 261120
      %v2062 = vsel %vm2061, %v2029, %v1736
      %v2063 = vsel %vm2061, %v2030, %v1738
      %v2064 = vsel %vm2061, %v2031, %v1740
      %v2065 = vsel %vm2061, %v2032, %v1742
      %v2066 = vsel %vm2061, %v2033, %v1744
      %v2067 = vsel %vm2061, %v2034, %v1746
      %v2068 = vsel %vm2061, %v2035, %v1748
      %v2069 = vsel %vm2061, %v2036, %v1750
      %v2070 = vsel %vm2061, %v2037, %v1752
      %v2071 = vsel %vm2061, %v2038, %v1754
      %v2072 = vsel %vm2061, %v2039, %v1756
      %v2073 = vsel %vm2061, %v2040, %v1758
      %v2074 = vsel %vm2061, %v2041, %v1760
      %v2075 = vsel %vm2061, %v2042, %v1762
      %v2076 = vsel %vm2061, %v2043, %v1764
      %v2077 = vsel %vm2061, %v2044, %v1766
      %v2078 = vsel %vm2061, %v2045, %v1768
      %v2079 = vsel %vm2061, %v2046, %v1770
      %v2080 = vsel %vm2061, %v2047, %v1772
      %v2081 = vsel %vm2061, %v2048, %v1774
      %v2082 = vsel %vm2061, %v2049, %v1776
      %v2083 = vsel %vm2061, %v2050, %v1778
      %v2084 = vsel %vm2061, %v2051, %v1780
      %v2085 = vsel %vm2061, %v2052, %v1782
      %v2086 = vsel %vm2061, %v2053, %v1784
      %v2087 = vsel %vm2061, %v2054, %v1786
      %v2088 = vsel %vm2061, %v2055, %v1788
      %v2089 = vsel %vm2061, %v2056, %v1790
      %v2090 = vsel %vm2061, %v2057, %v1792
      %v2091 = vsel %vm2061, %v2058, %v1794
      %v2092 = vsel %vm2061, %v2059, %v1796
      %v2093 = vsel %vm2061, %v2060, %v1798
      %v2094 = vld [vmem:[%s1] sm:$0xff]
      %v2095 = vld [vmem:[%s1 + $0x8] sm:$0xff]
      %v2096 = vld [vmem:[%s1 + $0x10] sm:$0xff]
      %v2097 = vld [vmem:[%s1 + $0x18] sm:$0xff]
      %v2098 = vld [vmem:[%s1 + $0x20] sm:$0xf]
      %v2099 = vld [vmem:[%s2] sm:$0x1]
      %v2101 = vlaneseq
      %v2102 = vshrl.u32 %v2101, 7
      %v2103 = vsub.s32 0, %v2102
      %v2104 = vrot.slane %v2099, %v2103
      %vm2106 = vcmask 293888
      %v2108 = vsel %vm2106, %v2062, 0
      %v2111 = vsel %vm2106, %v2063, 0
      %v2114 = vsel %vm2106, %v2064, 0
      %v2117 = vsel %vm2106, %v2065, 0
      %v2120 = vsel %vm2106, %v2066, 0
      %v2123 = vsel %vm2106, %v2067, 0
      %v2126 = vsel %vm2106, %v2068, 0
      %v2129 = vsel %vm2106, %v2069, 0
      %v2132 = vsel %vm2106, %v2070, 0
      %v2135 = vsel %vm2106, %v2071, 0
      %v2138 = vsel %vm2106, %v2072, 0
      %v2141 = vsel %vm2106, %v2073, 0
      %v2144 = vsel %vm2106, %v2074, 0
      %v2147 = vsel %vm2106, %v2075, 0
      %v2150 = vsel %vm2106, %v2076, 0
      %v2153 = vsel %vm2106, %v2077, 0
      %v2156 = vsel %vm2106, %v2078, 0
      %v2159 = vsel %vm2106, %v2079, 0
      %v2162 = vsel %vm2106, %v2080, 0
      %v2165 = vsel %vm2106, %v2081, 0
      %v2168 = vsel %vm2106, %v2082, 0
      %v2171 = vsel %vm2106, %v2083, 0
      %v2174 = vsel %vm2106, %v2084, 0
      %v2177 = vsel %vm2106, %v2085, 0
      %v2180 = vsel %vm2106, %v2086, 0
      %v2183 = vsel %vm2106, %v2087, 0
      %v2186 = vsel %vm2106, %v2088, 0
      %v2189 = vsel %vm2106, %v2089, 0
      %v2192 = vsel %vm2106, %v2090, 0
      %v2195 = vsel %vm2106, %v2091, 0
      %v2198 = vsel %vm2106, %v2092, 0
      %v2201 = vsel %vm2106, %v2093, 0
      %vm2203 = vcmask 1043456
      %v2205 = vsel %vm2203, %v2098, 0
      %2207 = vmatprep.subr.mxu0 0.0
      %2208 = vmatpush1.msra.mxu0 %v2094
      %2209 = vmatprep.subr.mxu0 0.0
      %2210 = vmatpush1.msra.mxu0 %v2095
      %2211 = vmatprep.subr.mxu0 0.0
      %2212 = vmatpush1.msra.mxu0 %v2096
      %2213 = vmatprep.subr.mxu0 0.0
      %2214 = vmatpush1.msra.mxu0 %v2097
      %2215 = vmatprep.subr.mxu0 0.0
      %2216 = vmatpush1.msra.mxu0 %v2205
      %2217 = vmatprep.subr.mxu0 0.0
      %2218 = vmatpush1.msra.mxu0 0.0
      %2219 = vmatprep.subr.mxu0 0.0
      %2220 = vmatpush1.msra.mxu0 0.0
      %2221 = vmatprep.subr.mxu0 0.0
      %2222 = vmatpush1.msra.mxu0 0.0
      %2223 = vmatprep.subr.mxu0 0.0
      %2224 = vmatpush1.msra.mxu0 0.0
      %2225 = vmatprep.subr.mxu0 0.0
      %2226 = vmatpush1.msra.mxu0 0.0
      %2227 = vmatprep.subr.mxu0 0.0
      %2228 = vmatpush1.msra.mxu0 0.0
      %2229 = vmatprep.subr.mxu0 0.0
      %2230 = vmatpush1.msra.mxu0 0.0
      %2231 = vmatprep.subr.mxu0 0.0
      %2232 = vmatpush1.msra.mxu0 0.0
      %2233 = vmatprep.subr.mxu0 0.0
      %2234 = vmatpush1.msra.mxu0 0.0
      %2235 = vmatprep.subr.mxu0 0.0
      %2236 = vmatpush1.msra.mxu0 0.0
      %2237 = vmatprep.subr.mxu0 0.0
      %2238 = vmatpush1.msra.mxu0 0.0
      %2239 = vmatprep.subr.mxu0 0.0
      %2240 = vmatpush1.msra.mxu0 0.0
      %2241 = vmatprep.subr.mxu0 0.0
      %2242 = vmatpush1.msra.mxu0 0.0
      %2243 = vmatprep.subr.mxu0 0.0
      %2244 = vmatpush1.msra.mxu0 0.0
      %2245 = vmatprep.subr.mxu0 0.0
      %2246 = vmatpush1.msra.mxu0 0.0
      %2247 = vmatprep.subr.mxu0 0.0
      %2248 = vmatpush1.msra.mxu0 0.0
      %2249 = vmatprep.subr.mxu0 0.0
      %2250 = vmatpush1.msra.mxu0 0.0
      %2251 = vmatprep.subr.mxu0 0.0
      %2252 = vmatpush1.msra.mxu0 0.0
      %2253 = vmatprep.subr.mxu0 0.0
      %2254 = vmatpush1.msra.mxu0 0.0
      %2255 = vmatprep.subr.mxu0 0.0
      %2256 = vmatpush1.msra.mxu0 0.0
      %2257 = vmatprep.subr.mxu0 0.0
      %2258 = vmatpush1.msra.mxu0 0.0
      %2259 = vmatprep.subr.mxu0 0.0
      %2260 = vmatpush1.msra.mxu0 0.0
      %2261 = vmatprep.subr.mxu0 0.0
      %2262 = vmatpush1.msra.mxu0 0.0
      %2263 = vmatprep.subr.mxu0 0.0
      %2264 = vmatpush1.msra.mxu0 0.0
      %2265 = vmatprep.subr.mxu0 0.0
      %2266 = vmatpush1.msra.mxu0 0.0
      %2267 = vmatprep.subr.mxu0 0.0
      %2268 = vmatpush1.msra.mxu0 0.0
      %2269 = vmatprep.subr.mxu0 0.0
      %2270 = vmatpush1.msra.mxu0 0.0
      %2271 = vmatprep.mubr.f32.mxu0 0.0
      %2272 = vmatmul.mubr.f32.gmra.mrb[0].mxu0 %v2108
      %v2273 = vpop.f32.mrb[0].mxu0
      %v2274 = vadd.f32 %v2104, %v2273
      %v2275 = vpop.f32.mrb[0].mxu0
      %2276 = vmatprep.mubr.f32.mxu0 0.0
      %2277 = vmatmul.mubr.f32.gmra.mrb[0].mxu0 %v2111
      %v2278 = vpop.f32.mrb[0].mxu0
      %v2279 = vadd.f32 %v2104, %v2278
      %v2280 = vpop.f32.mrb[0].mxu0
      %2281 = vmatprep.mubr.f32.mxu0 0.0
      %2282 = vmatmul.mubr.f32.gmra.mrb[0].mxu0 %v2114
      %v2283 = vpop.f32.mrb[0].mxu0
      %v2284 = vadd.f32 %v2104, %v2283
      %v2285 = vpop.f32.mrb[0].mxu0
      %2286 = vmatprep.mubr.f32.mxu0 0.0
      %2287 = vmatmul.mubr.f32.gmra.mrb[0].mxu0 %v2117
      %v2288 = vpop.f32.mrb[0].mxu0
      %v2289 = vadd.f32 %v2104, %v2288
      %v2290 = vpop.f32.mrb[0].mxu0
      %2291 = vmatprep.mubr.f32.mxu0 0.0
      %2292 = vmatmul.mubr.f32.gmra.mrb[0].mxu0 %v2120
      %v2293 = vpop.f32.mrb[0].mxu0
      %v2294 = vadd.f32 %v2104, %v2293
      %v2295 = vpop.f32.mrb[0].mxu0
      %2296 = vmatprep.mubr.f32.mxu0 0.0
      %2297 = vmatmul.mubr.f32.gmra.mrb[0].mxu0 %v2123
      %v2298 = vpop.f32.mrb[0].mxu0
      %v2299 = vadd.f32 %v2104, %v2298
      %v2300 = vpop.f32.mrb[0].mxu0
      %2301 = vmatprep.mubr.f32.mxu0 0.0
      %2302 = vmatmul.mubr.f32.gmra.mrb[0].mxu0 %v2126
      %v2303 = vpop.f32.mrb[0].mxu0
      %v2304 = vadd.f32 %v2104, %v2303
      %v2305 = vpop.f32.mrb[0].mxu0
      %2306 = vmatprep.mubr.f32.mxu0 0.0
      %2307 = vmatmul.mubr.f32.gmra.mrb[0].mxu0 %v2129
      %v2308 = vpop.f32.mrb[0].mxu0
      %v2309 = vadd.f32 %v2104, %v2308
      %v2310 = vpop.f32.mrb[0].mxu0
      %2311 = vmatprep.mubr.f32.mxu0 0.0
      %2312 = vmatmul.mubr.f32.gmra.mrb[0].mxu0 %v2132
      %v2313 = vpop.f32.mrb[0].mxu0
      %v2314 = vadd.f32 %v2104, %v2313
      %v2315 = vpop.f32.mrb[0].mxu0
      %2316 = vmatprep.mubr.f32.mxu0 0.0
      %2317 = vmatmul.mubr.f32.gmra.mrb[0].mxu0 %v2135
      %v2318 = vpop.f32.mrb[0].mxu0
      %v2319 = vadd.f32 %v2104, %v2318
      %v2320 = vpop.f32.mrb[0].mxu0
      %2321 = vmatprep.mubr.f32.mxu0 0.0
      %2322 = vmatmul.mubr.f32.gmra.mrb[0].mxu0 %v2138
      %v2323 = vpop.f32.mrb[0].mxu0
      %v2324 = vadd.f32 %v2104, %v2323
      %v2325 = vpop.f32.mrb[0].mxu0
      %2326 = vmatprep.mubr.f32.mxu0 0.0
      %2327 = vmatmul.mubr.f32.gmra.mrb[0].mxu0 %v2141
      %v2328 = vpop.f32.mrb[0].mxu0
      %v2329 = vadd.f32 %v2104, %v2328
      %v2330 = vpop.f32.mrb[0].mxu0
      %2331 = vmatprep.mubr.f32.mxu0 0.0
      %2332 = vmatmul.mubr.f32.gmra.mrb[0].mxu0 %v2144
      %v2333 = vpop.f32.mrb[0].mxu0
      %v2334 = vadd.f32 %v2104, %v2333
      %v2335 = vpop.f32.mrb[0].mxu0
      %2336 = vmatprep.mubr.f32.mxu0 0.0
      %2337 = vmatmul.mubr.f32.gmra.mrb[0].mxu0 %v2147
      %v2338 = vpop.f32.mrb[0].mxu0
      %v2339 = vadd.f32 %v2104, %v2338
      %v2340 = vpop.f32.mrb[0].mxu0
      %2341 = vmatprep.mubr.f32.mxu0 0.0
      %2342 = vmatmul.mubr.f32.gmra.mrb[0].mxu0 %v2150
      %v2343 = vpop.f32.mrb[0].mxu0
      %v2344 = vadd.f32 %v2104, %v2343
      %v2345 = vpop.f32.mrb[0].mxu0
      %2346 = vmatprep.mubr.f32.mxu0 0.0
      %2347 = vmatmul.mubr.f32.gmra.mrb[0].mxu0 %v2153
      %v2348 = vpop.f32.mrb[0].mxu0
      %v2349 = vadd.f32 %v2104, %v2348
      %v2350 = vpop.f32.mrb[0].mxu0
      %2351 = vmatprep.mubr.f32.mxu0 0.0
      %2352 = vmatmul.mubr.f32.gmra.mrb[0].mxu0 %v2156
      %v2353 = vpop.f32.mrb[0].mxu0
      %v2354 = vadd.f32 %v2104, %v2353
      %v2355 = vpop.f32.mrb[0].mxu0
      %2356 = vmatprep.mubr.f32.mxu0 0.0
      %2357 = vmatmul.mubr.f32.gmra.mrb[0].mxu0 %v2159
      %v2358 = vpop.f32.mrb[0].mxu0
      %v2359 = vadd.f32 %v2104, %v2358
      %v2360 = vpop.f32.mrb[0].mxu0
      %2361 = vmatprep.mubr.f32.mxu0 0.0
      %2362 = vmatmul.mubr.f32.gmra.mrb[0].mxu0 %v2162
      %v2363 = vpop.f32.mrb[0].mxu0
      %v2364 = vadd.f32 %v2104, %v2363
      %v2365 = vpop.f32.mrb[0].mxu0
      %2366 = vmatprep.mubr.f32.mxu0 0.0
      %2367 = vmatmul.mubr.f32.gmra.mrb[0].mxu0 %v2165
      %v2368 = vpop.f32.mrb[0].mxu0
      %v2369 = vadd.f32 %v2104, %v2368
      %v2370 = vpop.f32.mrb[0].mxu0
      %2371 = vmatprep.mubr.f32.mxu0 0.0
      %2372 = vmatmul.mubr.f32.gmra.mrb[0].mxu0 %v2168
      %v2373 = vpop.f32.mrb[0].mxu0
      %v2374 = vadd.f32 %v2104, %v2373
      %v2375 = vpop.f32.mrb[0].mxu0
      %2376 = vmatprep.mubr.f32.mxu0 0.0
      %2377 = vmatmul.mubr.f32.gmra.mrb[0].mxu0 %v2171
      %v2378 = vpop.f32.mrb[0].mxu0
      %v2379 = vadd.f32 %v2104, %v2378
      %v2380 = vpop.f32.mrb[0].mxu0
      %2381 = vmatprep.mubr.f32.mxu0 0.0
      %2382 = vmatmul.mubr.f32.gmra.mrb[0].mxu0 %v2174
      %v2383 = vpop.f32.mrb[0].mxu0
      %v2384 = vadd.f32 %v2104, %v2383
      %v2385 = vpop.f32.mrb[0].mxu0
      %2386 = vmatprep.mubr.f32.mxu0 0.0
      %2387 = vmatmul.mubr.f32.gmra.mrb[0].mxu0 %v2177
      %v2388 = vpop.f32.mrb[0].mxu0
      %v2389 = vadd.f32 %v2104, %v2388
      %v2390 = vpop.f32.mrb[0].mxu0
      %2391 = vmatprep.mubr.f32.mxu0 0.0
      %2392 = vmatmul.mubr.f32.gmra.mrb[0].mxu0 %v2180
      %v2393 = vpop.f32.mrb[0].mxu0
      %v2394 = vadd.f32 %v2104, %v2393
      %v2395 = vpop.f32.mrb[0].mxu0
      %2396 = vmatprep.mubr.f32.mxu0 0.0
      %2397 = vmatmul.mubr.f32.gmra.mrb[0].mxu0 %v2183
      %v2398 = vpop.f32.mrb[0].mxu0
      %v2399 = vadd.f32 %v2104, %v2398
      %v2400 = vpop.f32.mrb[0].mxu0
      %2401 = vmatprep.mubr.f32.mxu0 0.0
      %2402 = vmatmul.mubr.f32.gmra.mrb[0].mxu0 %v2186
      %v2403 = vpop.f32.mrb[0].mxu0
      %v2404 = vadd.f32 %v2104, %v2403
      %v2405 = vpop.f32.mrb[0].mxu0
      %2406 = vmatprep.mubr.f32.mxu0 0.0
      %2407 = vmatmul.mubr.f32.gmra.mrb[0].mxu0 %v2189
      %v2408 = vpop.f32.mrb[0].mxu0
      %v2409 = vadd.f32 %v2104, %v2408
      %v2410 = vpop.f32.mrb[0].mxu0
      %2411 = vmatprep.mubr.f32.mxu0 0.0
      %2412 = vmatmul.mubr.f32.gmra.mrb[0].mxu0 %v2192
      %v2413 = vpop.f32.mrb[0].mxu0
      %v2414 = vadd.f32 %v2104, %v2413
      %v2415 = vpop.f32.mrb[0].mxu0
      %2416 = vmatprep.mubr.f32.mxu0 0.0
      %2417 = vmatmul.mubr.f32.gmra.mrb[0].mxu0 %v2195
      %v2418 = vpop.f32.mrb[0].mxu0
      %v2419 = vadd.f32 %v2104, %v2418
      %v2420 = vpop.f32.mrb[0].mxu0
      %2421 = vmatprep.mubr.f32.mxu0 0.0
      %2422 = vmatmul.mubr.f32.gmra.mrb[0].mxu0 %v2198
      %v2423 = vpop.f32.mrb[0].mxu0
      %v2424 = vadd.f32 %v2104, %v2423
      %v2425 = vpop.f32.mrb[0].mxu0
      %2426 = vmatprep.mubr.f32.mxu0 0.0
      %2427 = vmatmul.mubr.f32.gmra.mrb[0].mxu0 %v2201
      %v2428 = vpop.f32.mrb[0].mxu0
      %v2429 = vadd.f32 %v2104, %v2428
      %v2430 = vpop.f32.mrb[0].mxu0
      %2431 = vdwg.mxu0
      %2432 = vst.msk [vmem:[%s170] sm:$0xff] %vm1863, %v2274
      %2433 = vst.msk [vmem:[%s170 + $0x8] sm:$0xff] %vm1863, %v2279
      %2434 = vst.msk [vmem:[%s170 + $0x10] sm:$0xff] %vm1863, %v2284
      %2435 = vst.msk [vmem:[%s170 + $0x18] sm:$0xff] %vm1863, %v2289
      %2436 = vst.msk [vmem:[%s170 + $0x20] sm:$0xff] %vm1863, %v2294
      %2437 = vst.msk [vmem:[%s170 + $0x28] sm:$0xff] %vm1863, %v2299
      %2438 = vst.msk [vmem:[%s170 + $0x30] sm:$0xff] %vm1863, %v2304
      %2439 = vst.msk [vmem:[%s170 + $0x38] sm:$0xff] %vm1863, %v2309
      %2440 = vst.msk [vmem:[%s170 + $0x40] sm:$0xff] %vm1863, %v2314
      %2441 = vst.msk [vmem:[%s170 + $0x48] sm:$0xff] %vm1863, %v2319
      %2442 = vst.msk [vmem:[%s170 + $0x50] sm:$0xff] %vm1863, %v2324
      %2443 = vst.msk [vmem:[%s170 + $0x58] sm:$0xff] %vm1863, %v2329
      %2444 = vst.msk [vmem:[%s170 + $0x60] sm:$0xff] %vm1863, %v2334
      %2445 = vst.msk [vmem:[%s170 + $0x68] sm:$0xff] %vm1863, %v2339
      %2446 = vst.msk [vmem:[%s170 + $0x70] sm:$0xff] %vm1863, %v2344
      %2447 = vst.msk [vmem:[%s170 + $0x78] sm:$0xff] %vm1863, %v2349
      %2448 = vst.msk [vmem:[%s170 + $0x80] sm:$0xff] %vm1863, %v2354
      %2449 = vst.msk [vmem:[%s170 + $0x88] sm:$0xff] %vm1863, %v2359
      %2450 = vst.msk [vmem:[%s170 + $0x90] sm:$0xff] %vm1863, %v2364
      %2451 = vst.msk [vmem:[%s170 + $0x98] sm:$0xff] %vm1863, %v2369
      %2452 = vst.msk [vmem:[%s170 + $0xa0] sm:$0xff] %vm1863, %v2374
      %2453 = vst.msk [vmem:[%s170 + $0xa8] sm:$0xff] %vm1863, %v2379
      %2454 = vst.msk [vmem:[%s170 + $0xb0] sm:$0xff] %vm1863, %v2384
      %2455 = vst.msk [vmem:[%s170 + $0xb8] sm:$0xff] %vm1863, %v2389
      %2456 = vst.msk [vmem:[%s170 + $0xc0] sm:$0xff] %vm1863, %v2394
      %2457 = vst.msk [vmem:[%s170 + $0xc8] sm:$0xff] %vm1863, %v2399
      %2458 = vst.msk [vmem:[%s170 + $0xd0] sm:$0xff] %vm1863, %v2404
      %2459 = vst.msk [vmem:[%s170 + $0xd8] sm:$0xff] %vm1863, %v2409
      %2460 = vst.msk [vmem:[%s170 + $0xe0] sm:$0xff] %vm1863, %v2414
      %2461 = vst.msk [vmem:[%s170 + $0xe8] sm:$0xff] %vm1863, %v2419
      %2462 = vst.msk [vmem:[%s170 + $0xf0] sm:$0xff] %vm1863, %v2424
      %2463 = vst.msk [vmem:[%s170 + $0xf8] sm:$0xff] %vm1863, %v2429
      %p2464 = scmp.lt.s32.totalorder %s14, 1
      %s2465 = scalar_select %p2464, %s14, 1
      %s2466 = smul.addr %s2465, 32
      %s2467 = smul.addr %s2466, 8
      %s2468 = scalar_lea.vmem %s3, %s2467
      // Predicated region
      $region33: #{tpu_custom_call.1} parent=31 // pred_check
        %p2469 = pneg %p100
      $region34: #{tpu_custom_call.1} parent=31 // pred_check_branch
        %2471 = sbr.rel (%p2469) target = $region36
      $region35: #{tpu_custom_call.1} parent=31 // pred_region
        _
      $region36: #{tpu_custom_call.1} parent=31 // pred_fallthru
        _
    $region32: #{tpu_custom_call.1} parent=5 // pred_fallthru
      _
    %p2472 = scmp.le.s32.totalorder 2, %s9
    // Predicated region
    $region37: #{tpu_custom_call.1} parent=5 // pred_check
      %p2473 = pneg %p2472
    $region38: #{tpu_custom_call.1} parent=5 // pred_check_branch
      %2475 = sbr.rel (%p2473) target = $region40
    $region39: #{tpu_custom_call.1} parent=5 // pred_region
      %s2476 = ssub.s32 %s9, 2
      // Predicated region
      $region41: #{tpu_custom_call.1} parent=39 // pred_check
        %p2477 = pneg %p106
      $region42: #{tpu_custom_call.1} parent=39 // pred_check_branch
        %2479 = sbr.rel (%p2477) target = $region44
      $region43: #{tpu_custom_call.1} parent=39 // pred_region
        %p2480 = scmp.lt.s32.totalorder %s15, 1
        %s2481 = scalar_select %p2480, %s15, 1
        %s2482 = smul.addr %s2481, 32
        %s2483 = smul.addr %s2482, 8
        %s2484 = scalar_lea.vmem %s3, %s2483
      $region44: #{tpu_custom_call.1} parent=39 // pred_fallthru
        _
    $region40: #{tpu_custom_call.1} parent=5 // pred_fallthru
      _
  $region6: #{tpu_custom_call.1} parent=0 // loop_footer
    %s13 = sadd.s32 1, %s9
  $region7: #{tpu_custom_call.1} parent=0 // loop_footer_branch
    %8 = sbr.rel target = $region3
  $region8: #{tpu_custom_call.1} parent=0 // loop_exit
    _

</llo_original>
